<compile_context>
chip_gen: v6e
topology: v6e:2x2x1
jax: 0.10.0
libtpu: 0.0.40
codegen_flags: <defaults>
</compile_context>

<pallas_src>
import functools

import jax
import jax.numpy as jnp
from jax.experimental import pallas as pl
from jax.experimental.pallas import tpu as pltpu


_HW_CHUNK_MAX = 8 * 1024  # lanes per H*W chunk when tiling the reduction axis


def _round_up(a: int, b: int) -> int:
    return (a + b - 1) // b * b


def _round_down(a: int, b: int) -> int:
    return (a // b) * b


def _num_tensorcores() -> int:
    """Best-effort query of TensorCores per chip (v7x has 2, v5e/v6e have 1)."""
    try:
        info = pltpu.get_tpu_info()
        for attr in ("num_cores", "core_count", "num_tensorcores",
                     "tensorcore_count", "cores_per_chip"):
            val = getattr(info, attr, None)
            if isinstance(val, int) and 1 <= val <= 8:
                return val
    except Exception:
        pass
    try:
        kind = jax.devices()[0].device_kind.lower()
        if "v7" in kind:
            return 2
    except Exception:
        pass
    return 1


# ----------------------------------------------------------------------------
# Kernels
# ----------------------------------------------------------------------------
def _mean_rows_single_kernel(x_ref, o_ref, *, hw):
    """Single H*W chunk: one load, one lane-reduce, scale, store."""
    x = x_ref[...].astype(jnp.float32)
    o_ref[...] = (jnp.sum(x, axis=-1, keepdims=True)
                  * jnp.float32(1.0 / hw)).astype(o_ref.dtype)


def _mean_rows_multi_kernel(x_ref, o_ref, acc_ref, *, hw, hw_chunk, num_hw):
    """Multi-chunk reduction with a (tile_rows, 128) f32 lane accumulator.

    x_ref:   (tile_rows, hw_chunk) input block
    o_ref:   (tile_rows, 1) output block (written on last reduction step)
    acc_ref: (tile_rows, 128) f32 scratch of per-lane partial sums
    """
    k = pl.program_id(1)

    @pl.when(k == 0)
    def _init():
        acc_ref[...] = jnp.zeros_like(acc_ref)

    def _accum(valid):
        # `valid` is a *Python int* number of valid lanes in this chunk.
        s = acc_ref[...]
        n_full = valid // 128
        for j in range(n_full):
            s = s + x_ref[:, j * 128:(j + 1) * 128].astype(jnp.float32)
        rem = valid - n_full * 128
        if rem:
            xj = x_ref[:, n_full * 128:(n_full + 1) * 128].astype(jnp.float32)
            lane = jax.lax.broadcasted_iota(jnp.int32, xj.shape, 1)
            s = s + jnp.where(lane < rem, xj, 0.0)
        acc_ref[...] = s

    last_valid = hw - (num_hw - 1) * hw_chunk  # python int, > 0
    if last_valid == hw_chunk:
        # H*W divides evenly into chunks: every step is full, no masking.
        _accum(hw_chunk)
    else:
        @pl.when(k < num_hw - 1)
        def _full_chunk():
            _accum(hw_chunk)

        @pl.when(k == num_hw - 1)
        def _partial_chunk():
            _accum(last_valid)

    @pl.when(k == num_hw - 1)
    def _finalize():
        total = jnp.sum(acc_ref[...], axis=-1, keepdims=True)
        o_ref[...] = (total * jnp.float32(1.0 / hw)).astype(o_ref.dtype)


# ----------------------------------------------------------------------------
# Wrapper
# ----------------------------------------------------------------------------
def spatial_mean_keepdim(x: jax.Array) -> jax.Array:
    """Equivalent of torch: x.mean((2, 3), keepdim=True) for NCHW input.

    Accumulation is done in f32 regardless of input dtype (slightly more
    accurate than torch's in-dtype mean for bf16/f16 inputs; intentional).
    """
    n, c, h, w = x.shape
    rows = n * c
    hw = h * w
    x2d = x.reshape(rows, hw)
    itemsize = x2d.dtype.itemsize

    num_tc = _num_tensorcores()
    block_budget = (8 if num_tc >= 2 else 4) * 1024 * 1024

    # ---- H*W (reduction) axis tiling --------------------------------------
    if _round_up(hw, 128) <= _HW_CHUNK_MAX:
        hw_chunk = hw  # single chunk; block last dim == full array dim (exempt)
    else:
        hw_chunk = _HW_CHUNK_MAX  # multiple of 128
    num_hw = pl.cdiv(hw, hw_chunk)
    hw_chunk_padded = _round_up(hw_chunk, 128)

    # ---- row (parallel) axis tiling ----------------------------------------
    rows_pad = _round_up(rows, 8)
    one_block_bytes = rows_pad * hw_chunk_padded * itemsize
    if one_block_bytes <= block_budget:
        # Small/medium problem: minimal grid.  1 tile on single-TC chips,
        # 2 balanced tiles on 2-TC chips so both cores pull from HBM.
        n_tiles = 2 if (num_tc >= 2 and rows >= 16) else 1
    else:
        rows_per_budget = max(
            8, _round_down(block_budget // (hw_chunk_padded * itemsize), 8))
        n_tiles = pl.cdiv(rows, rows_per_budget)
        if num_tc >= 2:
            n_tiles = _round_up(n_tiles, num_tc)  # balanced across cores
    tile_rows = _round_up(pl.cdiv(rows, n_tiles), 8)
    if tile_rows >= rows:
        tile_rows = rows  # full extent (exempt from the %8 requirement)
    num_row_tiles = pl.cdiv(rows, tile_rows)

    # ---- explicit scoped-VMEM budget (tight; no artificial floor) ----------
    tile_rows_pad = _round_up(tile_rows, 8)
    footprint = (
        2 * tile_rows_pad * hw_chunk_padded * itemsize   # double-buffered input
        + 2 * tile_rows_pad * 128 * max(itemsize, 4)     # double-buffered output (lane padded)
        + tile_rows_pad * 128 * 4                        # f32 lane accumulator scratch
        + 4 * 1024 * 1024                                # compiler/internal slack
    )
    vmem_limit = int(min(96 * 1024 * 1024, footprint))

    # ---- kernel / scratch selection ----------------------------------------
    if num_hw == 1:
        kernel = functools.partial(_mean_rows_single_kernel, hw=hw)
        scratch_shapes = []
    else:
        kernel = functools.partial(
            _mean_rows_multi_kernel, hw=hw, hw_chunk=hw_chunk, num_hw=int(num_hw))
        scratch_shapes = [pltpu.VMEM((tile_rows, 128), jnp.float32)]

    out2d = pl.pallas_call(
        kernel,
        out_shape=jax.ShapeDtypeStruct((rows, 1), x.dtype),
        grid_spec=pltpu.PrefetchScalarGridSpec(
            num_scalar_prefetch=0,
            grid=(num_row_tiles, num_hw),
            in_specs=[pl.BlockSpec((tile_rows, hw_chunk), lambda i, k: (i, k))],
            out_specs=pl.BlockSpec((tile_rows, 1), lambda i, k: (i, 0)),
            scratch_shapes=scratch_shapes,
        ),
        compiler_params=pltpu.CompilerParams(
            dimension_semantics=("parallel", "arbitrary"),
            vmem_limit_bytes=vmem_limit,
        ),
    )(x2d)

    return out2d.reshape(n, c, 1, 1)


if __name__ == "__main__":
    key = jax.random.PRNGKey(0)

    # Shape from the original module: NCHW = (1, 1344, 14, 14).
    x = jax.random.normal(key, (1, 1344, 14, 14), dtype=jnp.float32)
    out = jax.block_until_ready(spatial_mean_keepdim(x))
    ref = jnp.mean(x, axis=(2, 3), keepdims=True)
    assert out.shape == (1, 1344, 1, 1), out.shape
    assert jnp.allclose(out, ref, atol=1e-5, rtol=1e-5)

    # Exercise the tiled-H*W accumulator path (2 chunks, 128-aligned remainder).
    x2 = jax.random.normal(jax.random.PRNGKey(1), (1, 16, 96, 128), dtype=jnp.float32)
    out2 = jax.block_until_ready(spatial_mean_keepdim(x2))
    ref2 = jnp.mean(x2, axis=(2, 3), keepdims=True)
    assert out2.shape == (1, 16, 1, 1), out2.shape
    assert jnp.allclose(out2, ref2, atol=1e-5, rtol=1e-5)

    # Exercise the multi-chunk path with a non-128-aligned final chunk
    # (static boundary-slice masking).
    x3 = jax.random.normal(jax.random.PRNGKey(2), (1, 8, 170, 170), dtype=jnp.float32)
    out3 = jax.block_until_ready(spatial_mean_keepdim(x3))
    ref3 = jnp.mean(x3, axis=(2, 3), keepdims=True)
    assert out3.shape == (1, 8, 1, 1), out3.shape
    assert jnp.allclose(out3, ref3, atol=1e-5, rtol=1e-5)

    print("KERNEL_OK")
</pallas_src>

<mosaic_0001>
module attributes {stable_mosaic.version = 11 : i64} {
  func.func @_mean_rows_single_kernel(%arg0: i32, %arg1: i32, %arg2: memref<1344x196xf32, #tpu.memory_space<vmem>>, %arg3: memref<1344x1xf32, #tpu.memory_space<vmem>>) attributes {dimension_semantics = [#tpu.dimension_semantics<parallel>, #tpu.dimension_semantics<arbitrary>], iteration_bounds = array<i64: 1, 1>, scalar_prefetch = 0 : i64, scratch_operands = 0 : i64, tpu.core_type = #tpu.core_type<tc>, window_params = [{transform_indices = @transform_0, window_bounds = array<i64: 1344, 196>}, {transform_indices = @transform_1, window_bounds = array<i64: 1344, 1>}]} {
    %c0 = arith.constant 0 : index
    %c0_0 = arith.constant 0 : index
    %0 = vector.load %arg2[%c0, %c0_0] : memref<1344x196xf32, #tpu.memory_space<vmem>>, vector<1344x196xf32>
    %cst = arith.constant dense<0.000000e+00> : vector<1344xf32>
    %1 = vector.multi_reduction <add>, %0, %cst [1] : vector<1344x196xf32> to vector<1344xf32>
    %2 = vector.shape_cast %1 : vector<1344xf32> to vector<1344x1xf32>
    %cst_1 = arith.constant 0.00510204071 : f32
    %3 = vector.broadcast %cst_1 : f32 to vector<1344x1xf32>
    %4 = arith.mulf %2, %3 : vector<1344x1xf32>
    %c0_2 = arith.constant 0 : index
    %c0_3 = arith.constant 0 : index
    %5 = vector.load %arg3[%c0_2, %c0_3] : memref<1344x1xf32, #tpu.memory_space<vmem>>, vector<1344x1xf32>
    tpu.vector_store %arg3[%c0_2, %c0_3], %4 {strides = array<i32>} : memref<1344x1xf32, #tpu.memory_space<vmem>>, vector<1344x1xf32>,
    return
  }
  func.func @transform_0(%arg0: i32, %arg1: i32) -> (i32, i32) {
    %c0_i32 = arith.constant 0 : i32
    return %arg0, %arg1 : i32, i32
  }
  func.func @transform_1(%arg0: i32, %arg1: i32) -> (i32, i32) {
    %c0_i32 = arith.constant 0 : i32
    %c0_i32_0 = arith.constant 0 : i32
    return %arg0, %c0_i32 : i32, i32
  }
}

</mosaic_0001>

<llo_original>
// kernel: tpu_custom_call.1
$region0: #{tpu_custom_call.1}
  #allocation0 [shape = 'u32[]', space=smem, size = 0x4, offset = 0x4, fixed_abs, tag = 'smem constant byte address 0x4 - core index']
  #allocation1 [shape = 'u32[144,128]{1,0:T(1,128)}', space=vmem, size = 0x12000, scoped, tag = 'internal scratch']
  %s0 = inlined_call_operand.vmem [shape: f32[1344,196], index: 0, kind: input, shape index: {}]
  %s1 = inlined_call_operand.vmem [shape: f32[1344,1], index: 1, kind: output, shape index: {}]
  %s2 = sld [smem:[#allocation0]]
  $region14: #{tpu_custom_call.1} parent=0
    _
  %s4 = ssub.s32 1, %s2
  %s5 = scalar_select 0, %s4, %s2
  // Predicated region
  $region2: #{tpu_custom_call.1} parent=0 // pred_check
    _
  $region3: #{tpu_custom_call.1} parent=0 // pred_check_branch
    %7 = sbr.rel (0) target = $region5
  $region4: #{tpu_custom_call.1} parent=0 // pred_region
    _
  $region5: #{tpu_custom_call.1} parent=0 // pred_fallthru
    _
  %v8 = vld [vmem:[%s0] sm:$0xff]
  %v9 = vld [vmem:[%s0 + $0x8] sm:$0xff]
  %v10 = vld [vmem:[%s0 + $0x10] sm:$0xff]
  %v11 = vld [vmem:[%s0 + $0x18] sm:$0xff]
  %v12 = vld [vmem:[%s0 + $0x20] sm:$0xff]
  %v13 = vld [vmem:[%s0 + $0x28] sm:$0xff]
  %v14 = vld [vmem:[%s0 + $0x30] sm:$0xff]
  %v15 = vld [vmem:[%s0 + $0x38] sm:$0xff]
  %v16 = vld [vmem:[%s0 + $0x40] sm:$0xff]
  %v17 = vld [vmem:[%s0 + $0x48] sm:$0xff]
  %v18 = vld [vmem:[%s0 + $0x50] sm:$0xff]
  %v19 = vld [vmem:[%s0 + $0x58] sm:$0xff]
  %v20 = vld [vmem:[%s0 + $0x60] sm:$0xff]
  %v21 = vld [vmem:[%s0 + $0x68] sm:$0xff]
  %v22 = vld [vmem:[%s0 + $0x70] sm:$0xff]
  %v23 = vld [vmem:[%s0 + $0x78] sm:$0xff]
  %v24 = vld [vmem:[%s0 + $0x80] sm:$0xff]
  %v25 = vld [vmem:[%s0 + $0x88] sm:$0xff]
  %v26 = vld [vmem:[%s0 + $0x90] sm:$0xff]
  %v27 = vld [vmem:[%s0 + $0x98] sm:$0xff]
  %v28 = vld [vmem:[%s0 + $0xa0] sm:$0xff]
  %v29 = vld [vmem:[%s0 + $0xa8] sm:$0xff]
  %v30 = vld [vmem:[%s0 + $0xb0] sm:$0xff]
  %v31 = vld [vmem:[%s0 + $0xb8] sm:$0xff]
  %v32 = vld [vmem:[%s0 + $0xc0] sm:$0xff]
  %v33 = vld [vmem:[%s0 + $0xc8] sm:$0xff]
  %v34 = vld [vmem:[%s0 + $0xd0] sm:$0xff]
  %v35 = vld [vmem:[%s0 + $0xd8] sm:$0xff]
  %v36 = vld [vmem:[%s0 + $0xe0] sm:$0xff]
  %v37 = vld [vmem:[%s0 + $0xe8] sm:$0xff]
  %v38 = vld [vmem:[%s0 + $0xf0] sm:$0xff]
  %v39 = vld [vmem:[%s0 + $0xf8] sm:$0xff]
  %v40 = vld [vmem:[%s0 + $0x100] sm:$0xff]
  %v41 = vld [vmem:[%s0 + $0x108] sm:$0xff]
  %v42 = vld [vmem:[%s0 + $0x110] sm:$0xff]
  %v43 = vld [vmem:[%s0 + $0x118] sm:$0xff]
  %v44 = vld [vmem:[%s0 + $0x120] sm:$0xff]
  %v45 = vld [vmem:[%s0 + $0x128] sm:$0xff]
  %v46 = vld [vmem:[%s0 + $0x130] sm:$0xff]
  %v47 = vld [vmem:[%s0 + $0x138] sm:$0xff]
  %v48 = vld [vmem:[%s0 + $0x140] sm:$0xff]
  %v49 = vld [vmem:[%s0 + $0x148] sm:$0xff]
  %v50 = vld [vmem:[%s0 + $0x150] sm:$0xff]
  %v51 = vld [vmem:[%s0 + $0x158] sm:$0xff]
  %v52 = vld [vmem:[%s0 + $0x160] sm:$0xff]
  %v53 = vld [vmem:[%s0 + $0x168] sm:$0xff]
  %v54 = vld [vmem:[%s0 + $0x170] sm:$0xff]
  %v55 = vld [vmem:[%s0 + $0x178] sm:$0xff]
  %v56 = vld [vmem:[%s0 + $0x180] sm:$0xff]
  %v57 = vld [vmem:[%s0 + $0x188] sm:$0xff]
  %v58 = vld [vmem:[%s0 + $0x190] sm:$0xff]
  %v59 = vld [vmem:[%s0 + $0x198] sm:$0xff]
  %v60 = vld [vmem:[%s0 + $0x1a0] sm:$0xff]
  %v61 = vld [vmem:[%s0 + $0x1a8] sm:$0xff]
  %v62 = vld [vmem:[%s0 + $0x1b0] sm:$0xff]
  %v63 = vld [vmem:[%s0 + $0x1b8] sm:$0xff]
  %v64 = vld [vmem:[%s0 + $0x1c0] sm:$0xff]
  %v65 = vld [vmem:[%s0 + $0x1c8] sm:$0xff]
  %v66 = vld [vmem:[%s0 + $0x1d0] sm:$0xff]
  %v67 = vld [vmem:[%s0 + $0x1d8] sm:$0xff]
  %v68 = vld [vmem:[%s0 + $0x1e0] sm:$0xff]
  %v69 = vld [vmem:[%s0 + $0x1e8] sm:$0xff]
  %v70 = vld [vmem:[%s0 + $0x1f0] sm:$0xff]
  %v71 = vld [vmem:[%s0 + $0x1f8] sm:$0xff]
  %v72 = vld [vmem:[%s0 + $0x200] sm:$0xff]
  %v73 = vld [vmem:[%s0 + $0x208] sm:$0xff]
  %v74 = vld [vmem:[%s0 + $0x210] sm:$0xff]
  %v75 = vld [vmem:[%s0 + $0x218] sm:$0xff]
  %v76 = vld [vmem:[%s0 + $0x220] sm:$0xff]
  %v77 = vld [vmem:[%s0 + $0x228] sm:$0xff]
  %v78 = vld [vmem:[%s0 + $0x230] sm:$0xff]
  %v79 = vld [vmem:[%s0 + $0x238] sm:$0xff]
  %v80 = vld [vmem:[%s0 + $0x240] sm:$0xff]
  %v81 = vld [vmem:[%s0 + $0x248] sm:$0xff]
  %v82 = vld [vmem:[%s0 + $0x250] sm:$0xff]
  %v83 = vld [vmem:[%s0 + $0x258] sm:$0xff]
  %v84 = vld [vmem:[%s0 + $0x260] sm:$0xff]
  %v85 = vld [vmem:[%s0 + $0x268] sm:$0xff]
  %v86 = vld [vmem:[%s0 + $0x270] sm:$0xff]
  %v87 = vld [vmem:[%s0 + $0x278] sm:$0xff]
  %v88 = vld [vmem:[%s0 + $0x280] sm:$0xff]
  %v89 = vld [vmem:[%s0 + $0x288] sm:$0xff]
  %v90 = vld [vmem:[%s0 + $0x290] sm:$0xff]
  %v91 = vld [vmem:[%s0 + $0x298] sm:$0xff]
  %v92 = vld [vmem:[%s0 + $0x2a0] sm:$0xff]
  %v93 = vld [vmem:[%s0 + $0x2a8] sm:$0xff]
  %v94 = vld [vmem:[%s0 + $0x2b0] sm:$0xff]
  %v95 = vld [vmem:[%s0 + $0x2b8] sm:$0xff]
  %v96 = vld [vmem:[%s0 + $0x2c0] sm:$0xff]
  %v97 = vld [vmem:[%s0 + $0x2c8] sm:$0xff]
  %v98 = vld [vmem:[%s0 + $0x2d0] sm:$0xff]
  %v99 = vld [vmem:[%s0 + $0x2d8] sm:$0xff]
  %v100 = vld [vmem:[%s0 + $0x2e0] sm:$0xff]
  %v101 = vld [vmem:[%s0 + $0x2e8] sm:$0xff]
  %v102 = vld [vmem:[%s0 + $0x2f0] sm:$0xff]
  %v103 = vld [vmem:[%s0 + $0x2f8] sm:$0xff]
  %v104 = vld [vmem:[%s0 + $0x300] sm:$0xff]
  %v105 = vld [vmem:[%s0 + $0x308] sm:$0xff]
  %v106 = vld [vmem:[%s0 + $0x310] sm:$0xff]
  %v107 = vld [vmem:[%s0 + $0x318] sm:$0xff]
  %v108 = vld [vmem:[%s0 + $0x320] sm:$0xff]
  %v109 = vld [vmem:[%s0 + $0x328] sm:$0xff]
  %v110 = vld [vmem:[%s0 + $0x330] sm:$0xff]
  %v111 = vld [vmem:[%s0 + $0x338] sm:$0xff]
  %v112 = vld [vmem:[%s0 + $0x340] sm:$0xff]
  %v113 = vld [vmem:[%s0 + $0x348] sm:$0xff]
  %v114 = vld [vmem:[%s0 + $0x350] sm:$0xff]
  %v115 = vld [vmem:[%s0 + $0x358] sm:$0xff]
  %v116 = vld [vmem:[%s0 + $0x360] sm:$0xff]
  %v117 = vld [vmem:[%s0 + $0x368] sm:$0xff]
  %v118 = vld [vmem:[%s0 + $0x370] sm:$0xff]
  %v119 = vld [vmem:[%s0 + $0x378] sm:$0xff]
  %v120 = vld [vmem:[%s0 + $0x380] sm:$0xff]
  %v121 = vld [vmem:[%s0 + $0x388] sm:$0xff]
  %v122 = vld [vmem:[%s0 + $0x390] sm:$0xff]
  %v123 = vld [vmem:[%s0 + $0x398] sm:$0xff]
  %v124 = vld [vmem:[%s0 + $0x3a0] sm:$0xff]
  %v125 = vld [vmem:[%s0 + $0x3a8] sm:$0xff]
  %v126 = vld [vmem:[%s0 + $0x3b0] sm:$0xff]
  %v127 = vld [vmem:[%s0 + $0x3b8] sm:$0xff]
  %v128 = vld [vmem:[%s0 + $0x3c0] sm:$0xff]
  %v129 = vld [vmem:[%s0 + $0x3c8] sm:$0xff]
  %v130 = vld [vmem:[%s0 + $0x3d0] sm:$0xff]
  %v131 = vld [vmem:[%s0 + $0x3d8] sm:$0xff]
  %v132 = vld [vmem:[%s0 + $0x3e0] sm:$0xff]
  %v133 = vld [vmem:[%s0 + $0x3e8] sm:$0xff]
  %v134 = vld [vmem:[%s0 + $0x3f0] sm:$0xff]
  %v135 = vld [vmem:[%s0 + $0x3f8] sm:$0xff]
  %v136 = vld [vmem:[%s0 + $0x400] sm:$0xff]
  %v137 = vld [vmem:[%s0 + $0x408] sm:$0xff]
  %v138 = vld [vmem:[%s0 + $0x410] sm:$0xff]
  %v139 = vld [vmem:[%s0 + $0x418] sm:$0xff]
  %v140 = vld [vmem:[%s0 + $0x420] sm:$0xff]
  %v141 = vld [vmem:[%s0 + $0x428] sm:$0xff]
  %v142 = vld [vmem:[%s0 + $0x430] sm:$0xff]
  %v143 = vld [vmem:[%s0 + $0x438] sm:$0xff]
  %v144 = vld [vmem:[%s0 + $0x440] sm:$0xff]
  %v145 = vld [vmem:[%s0 + $0x448] sm:$0xff]
  %v146 = vld [vmem:[%s0 + $0x450] sm:$0xff]
  %v147 = vld [vmem:[%s0 + $0x458] sm:$0xff]
  %v148 = vld [vmem:[%s0 + $0x460] sm:$0xff]
  %v149 = vld [vmem:[%s0 + $0x468] sm:$0xff]
  %v150 = vld [vmem:[%s0 + $0x470] sm:$0xff]
  %v151 = vld [vmem:[%s0 + $0x478] sm:$0xff]
  %v152 = vld [vmem:[%s0 + $0x480] sm:$0xff]
  %v153 = vld [vmem:[%s0 + $0x488] sm:$0xff]
  %v154 = vld [vmem:[%s0 + $0x490] sm:$0xff]
  %v155 = vld [vmem:[%s0 + $0x498] sm:$0xff]
  %v156 = vld [vmem:[%s0 + $0x4a0] sm:$0xff]
  %v157 = vld [vmem:[%s0 + $0x4a8] sm:$0xff]
  %v158 = vld [vmem:[%s0 + $0x4b0] sm:$0xff]
  %v159 = vld [vmem:[%s0 + $0x4b8] sm:$0xff]
  %v160 = vld [vmem:[%s0 + $0x4c0] sm:$0xff]
  %v161 = vld [vmem:[%s0 + $0x4c8] sm:$0xff]
  %v162 = vld [vmem:[%s0 + $0x4d0] sm:$0xff]
  %v163 = vld [vmem:[%s0 + $0x4d8] sm:$0xff]
  %v164 = vld [vmem:[%s0 + $0x4e0] sm:$0xff]
  %v165 = vld [vmem:[%s0 + $0x4e8] sm:$0xff]
  %v166 = vld [vmem:[%s0 + $0x4f0] sm:$0xff]
  %v167 = vld [vmem:[%s0 + $0x4f8] sm:$0xff]
  %v168 = vld [vmem:[%s0 + $0x500] sm:$0xff]
  %v169 = vld [vmem:[%s0 + $0x508] sm:$0xff]
  %v170 = vld [vmem:[%s0 + $0x510] sm:$0xff]
  %v171 = vld [vmem:[%s0 + $0x518] sm:$0xff]
  %v172 = vld [vmem:[%s0 + $0x520] sm:$0xff]
  %v173 = vld [vmem:[%s0 + $0x528] sm:$0xff]
  %v174 = vld [vmem:[%s0 + $0x530] sm:$0xff]
  %v175 = vld [vmem:[%s0 + $0x538] sm:$0xff]
  %v176 = vld [vmem:[%s0 + $0x540] sm:$0xff]
  %v177 = vld [vmem:[%s0 + $0x548] sm:$0xff]
  %v178 = vld [vmem:[%s0 + $0x550] sm:$0xff]
  %v179 = vld [vmem:[%s0 + $0x558] sm:$0xff]
  %v180 = vld [vmem:[%s0 + $0x560] sm:$0xff]
  %v181 = vld [vmem:[%s0 + $0x568] sm:$0xff]
  %v182 = vld [vmem:[%s0 + $0x570] sm:$0xff]
  %v183 = vld [vmem:[%s0 + $0x578] sm:$0xff]
  %v184 = vld [vmem:[%s0 + $0x580] sm:$0xff]
  %v185 = vld [vmem:[%s0 + $0x588] sm:$0xff]
  %v186 = vld [vmem:[%s0 + $0x590] sm:$0xff]
  %v187 = vld [vmem:[%s0 + $0x598] sm:$0xff]
  %v188 = vld [vmem:[%s0 + $0x5a0] sm:$0xff]
  %v189 = vld [vmem:[%s0 + $0x5a8] sm:$0xff]
  %v190 = vld [vmem:[%s0 + $0x5b0] sm:$0xff]
  %v191 = vld [vmem:[%s0 + $0x5b8] sm:$0xff]
  %v192 = vld [vmem:[%s0 + $0x5c0] sm:$0xff]
  %v193 = vld [vmem:[%s0 + $0x5c8] sm:$0xff]
  %v194 = vld [vmem:[%s0 + $0x5d0] sm:$0xff]
  %v195 = vld [vmem:[%s0 + $0x5d8] sm:$0xff]
  %v196 = vld [vmem:[%s0 + $0x5e0] sm:$0xff]
  %v197 = vld [vmem:[%s0 + $0x5e8] sm:$0xff]
  %v198 = vld [vmem:[%s0 + $0x5f0] sm:$0xff]
  %v199 = vld [vmem:[%s0 + $0x5f8] sm:$0xff]
  %v200 = vld [vmem:[%s0 + $0x600] sm:$0xff]
  %v201 = vld [vmem:[%s0 + $0x608] sm:$0xff]
  %v202 = vld [vmem:[%s0 + $0x610] sm:$0xff]
  %v203 = vld [vmem:[%s0 + $0x618] sm:$0xff]
  %v204 = vld [vmem:[%s0 + $0x620] sm:$0xff]
  %v205 = vld [vmem:[%s0 + $0x628] sm:$0xff]
  %v206 = vld [vmem:[%s0 + $0x630] sm:$0xff]
  %v207 = vld [vmem:[%s0 + $0x638] sm:$0xff]
  %v208 = vld [vmem:[%s0 + $0x640] sm:$0xff]
  %v209 = vld [vmem:[%s0 + $0x648] sm:$0xff]
  %v210 = vld [vmem:[%s0 + $0x650] sm:$0xff]
  %v211 = vld [vmem:[%s0 + $0x658] sm:$0xff]
  %v212 = vld [vmem:[%s0 + $0x660] sm:$0xff]
  %v213 = vld [vmem:[%s0 + $0x668] sm:$0xff]
  %v214 = vld [vmem:[%s0 + $0x670] sm:$0xff]
  %v215 = vld [vmem:[%s0 + $0x678] sm:$0xff]
  %v216 = vld [vmem:[%s0 + $0x680] sm:$0xff]
  %v217 = vld [vmem:[%s0 + $0x688] sm:$0xff]
  %v218 = vld [vmem:[%s0 + $0x690] sm:$0xff]
  %v219 = vld [vmem:[%s0 + $0x698] sm:$0xff]
  %v220 = vld [vmem:[%s0 + $0x6a0] sm:$0xff]
  %v221 = vld [vmem:[%s0 + $0x6a8] sm:$0xff]
  %v222 = vld [vmem:[%s0 + $0x6b0] sm:$0xff]
  %v223 = vld [vmem:[%s0 + $0x6b8] sm:$0xff]
  %v224 = vld [vmem:[%s0 + $0x6c0] sm:$0xff]
  %v225 = vld [vmem:[%s0 + $0x6c8] sm:$0xff]
  %v226 = vld [vmem:[%s0 + $0x6d0] sm:$0xff]
  %v227 = vld [vmem:[%s0 + $0x6d8] sm:$0xff]
  %v228 = vld [vmem:[%s0 + $0x6e0] sm:$0xff]
  %v229 = vld [vmem:[%s0 + $0x6e8] sm:$0xff]
  %v230 = vld [vmem:[%s0 + $0x6f0] sm:$0xff]
  %v231 = vld [vmem:[%s0 + $0x6f8] sm:$0xff]
  %v232 = vld [vmem:[%s0 + $0x700] sm:$0xff]
  %v233 = vld [vmem:[%s0 + $0x708] sm:$0xff]
  %v234 = vld [vmem:[%s0 + $0x710] sm:$0xff]
  %v235 = vld [vmem:[%s0 + $0x718] sm:$0xff]
  %v236 = vld [vmem:[%s0 + $0x720] sm:$0xff]
  %v237 = vld [vmem:[%s0 + $0x728] sm:$0xff]
  %v238 = vld [vmem:[%s0 + $0x730] sm:$0xff]
  %v239 = vld [vmem:[%s0 + $0x738] sm:$0xff]
  %v240 = vld [vmem:[%s0 + $0x740] sm:$0xff]
  %v241 = vld [vmem:[%s0 + $0x748] sm:$0xff]
  %v242 = vld [vmem:[%s0 + $0x750] sm:$0xff]
  %v243 = vld [vmem:[%s0 + $0x758] sm:$0xff]
  %v244 = vld [vmem:[%s0 + $0x760] sm:$0xff]
  %v245 = vld [vmem:[%s0 + $0x768] sm:$0xff]
  %v246 = vld [vmem:[%s0 + $0x770] sm:$0xff]
  %v247 = vld [vmem:[%s0 + $0x778] sm:$0xff]
  %v248 = vld [vmem:[%s0 + $0x780] sm:$0xff]
  %v249 = vld [vmem:[%s0 + $0x788] sm:$0xff]
  %v250 = vld [vmem:[%s0 + $0x790] sm:$0xff]
  %v251 = vld [vmem:[%s0 + $0x798] sm:$0xff]
  %v252 = vld [vmem:[%s0 + $0x7a0] sm:$0xff]
  %v253 = vld [vmem:[%s0 + $0x7a8] sm:$0xff]
  %v254 = vld [vmem:[%s0 + $0x7b0] sm:$0xff]
  %v255 = vld [vmem:[%s0 + $0x7b8] sm:$0xff]
  %v256 = vld [vmem:[%s0 + $0x7c0] sm:$0xff]
  %v257 = vld [vmem:[%s0 + $0x7c8] sm:$0xff]
  %v258 = vld [vmem:[%s0 + $0x7d0] sm:$0xff]
  %v259 = vld [vmem:[%s0 + $0x7d8] sm:$0xff]
  %v260 = vld [vmem:[%s0 + $0x7e0] sm:$0xff]
  %v261 = vld [vmem:[%s0 + $0x7e8] sm:$0xff]
  %v262 = vld [vmem:[%s0 + $0x7f0] sm:$0xff]
  %v263 = vld [vmem:[%s0 + $0x7f8] sm:$0xff]
  %v264 = vld [vmem:[%s0 + $0x800] sm:$0xff]
  %v265 = vld [vmem:[%s0 + $0x808] sm:$0xff]
  %v266 = vld [vmem:[%s0 + $0x810] sm:$0xff]
  %v267 = vld [vmem:[%s0 + $0x818] sm:$0xff]
  %v268 = vld [vmem:[%s0 + $0x820] sm:$0xff]
  %v269 = vld [vmem:[%s0 + $0x828] sm:$0xff]
  %v270 = vld [vmem:[%s0 + $0x830] sm:$0xff]
  %v271 = vld [vmem:[%s0 + $0x838] sm:$0xff]
  %v272 = vld [vmem:[%s0 + $0x840] sm:$0xff]
  %v273 = vld [vmem:[%s0 + $0x848] sm:$0xff]
  %v274 = vld [vmem:[%s0 + $0x850] sm:$0xff]
  %v275 = vld [vmem:[%s0 + $0x858] sm:$0xff]
  %v276 = vld [vmem:[%s0 + $0x860] sm:$0xff]
  %v277 = vld [vmem:[%s0 + $0x868] sm:$0xff]
  %v278 = vld [vmem:[%s0 + $0x870] sm:$0xff]
  %v279 = vld [vmem:[%s0 + $0x878] sm:$0xff]
  %v280 = vld [vmem:[%s0 + $0x880] sm:$0xff]
  %v281 = vld [vmem:[%s0 + $0x888] sm:$0xff]
  %v282 = vld [vmem:[%s0 + $0x890] sm:$0xff]
  %v283 = vld [vmem:[%s0 + $0x898] sm:$0xff]
  %v284 = vld [vmem:[%s0 + $0x8a0] sm:$0xff]
  %v285 = vld [vmem:[%s0 + $0x8a8] sm:$0xff]
  %v286 = vld [vmem:[%s0 + $0x8b0] sm:$0xff]
  %v287 = vld [vmem:[%s0 + $0x8b8] sm:$0xff]
  %v288 = vld [vmem:[%s0 + $0x8c0] sm:$0xff]
  %v289 = vld [vmem:[%s0 + $0x8c8] sm:$0xff]
  %v290 = vld [vmem:[%s0 + $0x8d0] sm:$0xff]
  %v291 = vld [vmem:[%s0 + $0x8d8] sm:$0xff]
  %v292 = vld [vmem:[%s0 + $0x8e0] sm:$0xff]
  %v293 = vld [vmem:[%s0 + $0x8e8] sm:$0xff]
  %v294 = vld [vmem:[%s0 + $0x8f0] sm:$0xff]
  %v295 = vld [vmem:[%s0 + $0x8f8] sm:$0xff]
  %v296 = vld [vmem:[%s0 + $0x900] sm:$0xff]
  %v297 = vld [vmem:[%s0 + $0x908] sm:$0xff]
  %v298 = vld [vmem:[%s0 + $0x910] sm:$0xff]
  %v299 = vld [vmem:[%s0 + $0x918] sm:$0xff]
  %v300 = vld [vmem:[%s0 + $0x920] sm:$0xff]
  %v301 = vld [vmem:[%s0 + $0x928] sm:$0xff]
  %v302 = vld [vmem:[%s0 + $0x930] sm:$0xff]
  %v303 = vld [vmem:[%s0 + $0x938] sm:$0xff]
  %v304 = vld [vmem:[%s0 + $0x940] sm:$0xff]
  %v305 = vld [vmem:[%s0 + $0x948] sm:$0xff]
  %v306 = vld [vmem:[%s0 + $0x950] sm:$0xff]
  %v307 = vld [vmem:[%s0 + $0x958] sm:$0xff]
  %v308 = vld [vmem:[%s0 + $0x960] sm:$0xff]
  %v309 = vld [vmem:[%s0 + $0x968] sm:$0xff]
  %v310 = vld [vmem:[%s0 + $0x970] sm:$0xff]
  %v311 = vld [vmem:[%s0 + $0x978] sm:$0xff]
  %v312 = vld [vmem:[%s0 + $0x980] sm:$0xff]
  %v313 = vld [vmem:[%s0 + $0x988] sm:$0xff]
  %v314 = vld [vmem:[%s0 + $0x990] sm:$0xff]
  %v315 = vld [vmem:[%s0 + $0x998] sm:$0xff]
  %v316 = vld [vmem:[%s0 + $0x9a0] sm:$0xff]
  %v317 = vld [vmem:[%s0 + $0x9a8] sm:$0xff]
  %v318 = vld [vmem:[%s0 + $0x9b0] sm:$0xff]
  %v319 = vld [vmem:[%s0 + $0x9b8] sm:$0xff]
  %v320 = vld [vmem:[%s0 + $0x9c0] sm:$0xff]
  %v321 = vld [vmem:[%s0 + $0x9c8] sm:$0xff]
  %v322 = vld [vmem:[%s0 + $0x9d0] sm:$0xff]
  %v323 = vld [vmem:[%s0 + $0x9d8] sm:$0xff]
  %v324 = vld [vmem:[%s0 + $0x9e0] sm:$0xff]
  %v325 = vld [vmem:[%s0 + $0x9e8] sm:$0xff]
  %v326 = vld [vmem:[%s0 + $0x9f0] sm:$0xff]
  %v327 = vld [vmem:[%s0 + $0x9f8] sm:$0xff]
  %v328 = vld [vmem:[%s0 + $0xa00] sm:$0xff]
  %v329 = vld [vmem:[%s0 + $0xa08] sm:$0xff]
  %v330 = vld [vmem:[%s0 + $0xa10] sm:$0xff]
  %v331 = vld [vmem:[%s0 + $0xa18] sm:$0xff]
  %v332 = vld [vmem:[%s0 + $0xa20] sm:$0xff]
  %v333 = vld [vmem:[%s0 + $0xa28] sm:$0xff]
  %v334 = vld [vmem:[%s0 + $0xa30] sm:$0xff]
  %v335 = vld [vmem:[%s0 + $0xa38] sm:$0xff]
  %v336 = vld [vmem:[%s0 + $0xa40] sm:$0xff]
  %v337 = vld [vmem:[%s0 + $0xa48] sm:$0xff]
  %v338 = vld [vmem:[%s0 + $0xa50] sm:$0xff]
  %v339 = vld [vmem:[%s0 + $0xa58] sm:$0xff]
  %v340 = vld [vmem:[%s0 + $0xa60] sm:$0xff]
  %v341 = vld [vmem:[%s0 + $0xa68] sm:$0xff]
  %v342 = vld [vmem:[%s0 + $0xa70] sm:$0xff]
  %v343 = vld [vmem:[%s0 + $0xa78] sm:$0xff]
  %vm344 = vcmask 556032
  %v345 = vsel %vm344, %v9, 0.0
  %v346 = vadd.f32 %v8, %v345
  %347 = vadd.xlane.f32.xlu0 %v346
  %v348 = vpop.xlane.xlu0 %347
  %v349 = vsel %vm344, %v11, 0.0
  %v350 = vadd.f32 %v10, %v349
  %351 = vadd.xlane.f32.xlu0 %v350
  %v352 = vpop.xlane.xlu0 %351
  %v353 = vsel %vm344, %v13, 0.0
  %v354 = vadd.f32 %v12, %v353
  %355 = vadd.xlane.f32.xlu0 %v354
  %v356 = vpop.xlane.xlu0 %355
  %v357 = vsel %vm344, %v15, 0.0
  %v358 = vadd.f32 %v14, %v357
  %359 = vadd.xlane.f32.xlu0 %v358
  %v360 = vpop.xlane.xlu0 %359
  %v361 = vsel %vm344, %v17, 0.0
  %v362 = vadd.f32 %v16, %v361
  %363 = vadd.xlane.f32.xlu0 %v362
  %v364 = vpop.xlane.xlu0 %363
  %v365 = vsel %vm344, %v19, 0.0
  %v366 = vadd.f32 %v18, %v365
  %367 = vadd.xlane.f32.xlu0 %v366
  %v368 = vpop.xlane.xlu0 %367
  %v369 = vsel %vm344, %v21, 0.0
  %v370 = vadd.f32 %v20, %v369
  %371 = vadd.xlane.f32.xlu0 %v370
  %v372 = vpop.xlane.xlu0 %371
  %v373 = vsel %vm344, %v23, 0.0
  %v374 = vadd.f32 %v22, %v373
  %375 = vadd.xlane.f32.xlu0 %v374
  %v376 = vpop.xlane.xlu0 %375
  %v377 = vsel %vm344, %v25, 0.0
  %v378 = vadd.f32 %v24, %v377
  %379 = vadd.xlane.f32.xlu0 %v378
  %v380 = vpop.xlane.xlu0 %379
  %v381 = vsel %vm344, %v27, 0.0
  %v382 = vadd.f32 %v26, %v381
  %383 = vadd.xlane.f32.xlu0 %v382
  %v384 = vpop.xlane.xlu0 %383
  %v385 = vsel %vm344, %v29, 0.0
  %v386 = vadd.f32 %v28, %v385
  %387 = vadd.xlane.f32.xlu0 %v386
  %v388 = vpop.xlane.xlu0 %387
  %v389 = vsel %vm344, %v31, 0.0
  %v390 = vadd.f32 %v30, %v389
  %391 = vadd.xlane.f32.xlu0 %v390
  %v392 = vpop.xlane.xlu0 %391
  %v393 = vsel %vm344, %v33, 0.0
  %v394 = vadd.f32 %v32, %v393
  %395 = vadd.xlane.f32.xlu0 %v394
  %v396 = vpop.xlane.xlu0 %395
  %v397 = vsel %vm344, %v35, 0.0
  %v398 = vadd.f32 %v34, %v397
  %399 = vadd.xlane.f32.xlu0 %v398
  %v400 = vpop.xlane.xlu0 %399
  %v401 = vsel %vm344, %v37, 0.0
  %v402 = vadd.f32 %v36, %v401
  %403 = vadd.xlane.f32.xlu0 %v402
  %v404 = vpop.xlane.xlu0 %403
  %v405 = vsel %vm344, %v39, 0.0
  %v406 = vadd.f32 %v38, %v405
  %407 = vadd.xlane.f32.xlu0 %v406
  %v408 = vpop.xlane.xlu0 %407
  %v409 = vsel %vm344, %v41, 0.0
  %v410 = vadd.f32 %v40, %v409
  %411 = vadd.xlane.f32.xlu0 %v410
  %v412 = vpop.xlane.xlu0 %411
  %v413 = vsel %vm344, %v43, 0.0
  %v414 = vadd.f32 %v42, %v413
  %415 = vadd.xlane.f32.xlu0 %v414
  %v416 = vpop.xlane.xlu0 %415
  %v417 = vsel %vm344, %v45, 0.0
  %v418 = vadd.f32 %v44, %v417
  %419 = vadd.xlane.f32.xlu0 %v418
  %v420 = vpop.xlane.xlu0 %419
  %v421 = vsel %vm344, %v47, 0.0
  %v422 = vadd.f32 %v46, %v421
  %423 = vadd.xlane.f32.xlu0 %v422
  %v424 = vpop.xlane.xlu0 %423
  %v425 = vsel %vm344, %v49, 0.0
  %v426 = vadd.f32 %v48, %v425
  %427 = vadd.xlane.f32.xlu0 %v426
  %v428 = vpop.xlane.xlu0 %427
  %v429 = vsel %vm344, %v51, 0.0
  %v430 = vadd.f32 %v50, %v429
  %431 = vadd.xlane.f32.xlu0 %v430
  %v432 = vpop.xlane.xlu0 %431
  %v433 = vsel %vm344, %v53, 0.0
  %v434 = vadd.f32 %v52, %v433
  %435 = vadd.xlane.f32.xlu0 %v434
  %v436 = vpop.xlane.xlu0 %435
  %v437 = vsel %vm344, %v55, 0.0
  %v438 = vadd.f32 %v54, %v437
  %439 = vadd.xlane.f32.xlu0 %v438
  %v440 = vpop.xlane.xlu0 %439
  %v441 = vsel %vm344, %v57, 0.0
  %v442 = vadd.f32 %v56, %v441
  %443 = vadd.xlane.f32.xlu0 %v442
  %v444 = vpop.xlane.xlu0 %443
  %v445 = vsel %vm344, %v59, 0.0
  %v446 = vadd.f32 %v58, %v445
  %447 = vadd.xlane.f32.xlu0 %v446
  %v448 = vpop.xlane.xlu0 %447
  %v449 = vsel %vm344, %v61, 0.0
  %v450 = vadd.f32 %v60, %v449
  %451 = vadd.xlane.f32.xlu0 %v450
  %v452 = vpop.xlane.xlu0 %451
  %v453 = vsel %vm344, %v63, 0.0
  %v454 = vadd.f32 %v62, %v453
  %455 = vadd.xlane.f32.xlu0 %v454
  %v456 = vpop.xlane.xlu0 %455
  %v457 = vsel %vm344, %v65, 0.0
  %v458 = vadd.f32 %v64, %v457
  %459 = vadd.xlane.f32.xlu0 %v458
  %v460 = vpop.xlane.xlu0 %459
  %v461 = vsel %vm344, %v67, 0.0
  %v462 = vadd.f32 %v66, %v461
  %463 = vadd.xlane.f32.xlu0 %v462
  %v464 = vpop.xlane.xlu0 %463
  %v465 = vsel %vm344, %v69, 0.0
  %v466 = vadd.f32 %v68, %v465
  %467 = vadd.xlane.f32.xlu0 %v466
  %v468 = vpop.xlane.xlu0 %467
  %v469 = vsel %vm344, %v71, 0.0
  %v470 = vadd.f32 %v70, %v469
  %471 = vadd.xlane.f32.xlu0 %v470
  %v472 = vpop.xlane.xlu0 %471
  %v473 = vsel %vm344, %v73, 0.0
  %v474 = vadd.f32 %v72, %v473
  %475 = vadd.xlane.f32.xlu0 %v474
  %v476 = vpop.xlane.xlu0 %475
  %v477 = vsel %vm344, %v75, 0.0
  %v478 = vadd.f32 %v74, %v477
  %479 = vadd.xlane.f32.xlu0 %v478
  %v480 = vpop.xlane.xlu0 %479
  %v481 = vsel %vm344, %v77, 0.0
  %v482 = vadd.f32 %v76, %v481
  %483 = vadd.xlane.f32.xlu0 %v482
  %v484 = vpop.xlane.xlu0 %483
  %v485 = vsel %vm344, %v79, 0.0
  %v486 = vadd.f32 %v78, %v485
  %487 = vadd.xlane.f32.xlu0 %v486
  %v488 = vpop.xlane.xlu0 %487
  %v489 = vsel %vm344, %v81, 0.0
  %v490 = vadd.f32 %v80, %v489
  %491 = vadd.xlane.f32.xlu0 %v490
  %v492 = vpop.xlane.xlu0 %491
  %v493 = vsel %vm344, %v83, 0.0
  %v494 = vadd.f32 %v82, %v493
  %495 = vadd.xlane.f32.xlu0 %v494
  %v496 = vpop.xlane.xlu0 %495
  %v497 = vsel %vm344, %v85, 0.0
  %v498 = vadd.f32 %v84, %v497
  %499 = vadd.xlane.f32.xlu0 %v498
  %v500 = vpop.xlane.xlu0 %499
  %v501 = vsel %vm344, %v87, 0.0
  %v502 = vadd.f32 %v86, %v501
  %503 = vadd.xlane.f32.xlu0 %v502
  %v504 = vpop.xlane.xlu0 %503
  %v505 = vsel %vm344, %v89, 0.0
  %v506 = vadd.f32 %v88, %v505
  %507 = vadd.xlane.f32.xlu0 %v506
  %v508 = vpop.xlane.xlu0 %507
  %v509 = vsel %vm344, %v91, 0.0
  %v510 = vadd.f32 %v90, %v509
  %511 = vadd.xlane.f32.xlu0 %v510
  %v512 = vpop.xlane.xlu0 %511
  %v513 = vsel %vm344, %v93, 0.0
  %v514 = vadd.f32 %v92, %v513
  %515 = vadd.xlane.f32.xlu0 %v514
  %v516 = vpop.xlane.xlu0 %515
  %v517 = vsel %vm344, %v95, 0.0
  %v518 = vadd.f32 %v94, %v517
  %519 = vadd.xlane.f32.xlu0 %v518
  %v520 = vpop.xlane.xlu0 %519
  %v521 = vsel %vm344, %v97, 0.0
  %v522 = vadd.f32 %v96, %v521
  %523 = vadd.xlane.f32.xlu0 %v522
  %v524 = vpop.xlane.xlu0 %523
  %v525 = vsel %vm344, %v99, 0.0
  %v526 = vadd.f32 %v98, %v525
  %527 = vadd.xlane.f32.xlu0 %v526
  %v528 = vpop.xlane.xlu0 %527
  %v529 = vsel %vm344, %v101, 0.0
  %v530 = vadd.f32 %v100, %v529
  %531 = vadd.xlane.f32.xlu0 %v530
  %v532 = vpop.xlane.xlu0 %531
  %v533 = vsel %vm344, %v103, 0.0
  %v534 = vadd.f32 %v102, %v533
  %535 = vadd.xlane.f32.xlu0 %v534
  %v536 = vpop.xlane.xlu0 %535
  %v537 = vsel %vm344, %v105, 0.0
  %v538 = vadd.f32 %v104, %v537
  %539 = vadd.xlane.f32.xlu0 %v538
  %v540 = vpop.xlane.xlu0 %539
  %v541 = vsel %vm344, %v107, 0.0
  %v542 = vadd.f32 %v106, %v541
  %543 = vadd.xlane.f32.xlu0 %v542
  %v544 = vpop.xlane.xlu0 %543
  %v545 = vsel %vm344, %v109, 0.0
  %v546 = vadd.f32 %v108, %v545
  %547 = vadd.xlane.f32.xlu0 %v546
  %v548 = vpop.xlane.xlu0 %547
  %v549 = vsel %vm344, %v111, 0.0
  %v550 = vadd.f32 %v110, %v549
  %551 = vadd.xlane.f32.xlu0 %v550
  %v552 = vpop.xlane.xlu0 %551
  %v553 = vsel %vm344, %v113, 0.0
  %v554 = vadd.f32 %v112, %v553
  %555 = vadd.xlane.f32.xlu0 %v554
  %v556 = vpop.xlane.xlu0 %555
  %v557 = vsel %vm344, %v115, 0.0
  %v558 = vadd.f32 %v114, %v557
  %559 = vadd.xlane.f32.xlu0 %v558
  %v560 = vpop.xlane.xlu0 %559
  %v561 = vsel %vm344, %v117, 0.0
  %v562 = vadd.f32 %v116, %v561
  %563 = vadd.xlane.f32.xlu0 %v562
  %v564 = vpop.xlane.xlu0 %563
  %v565 = vsel %vm344, %v119, 0.0
  %v566 = vadd.f32 %v118, %v565
  %567 = vadd.xlane.f32.xlu0 %v566
  %v568 = vpop.xlane.xlu0 %567
  %v569 = vsel %vm344, %v121, 0.0
  %v570 = vadd.f32 %v120, %v569
  %571 = vadd.xlane.f32.xlu0 %v570
  %v572 = vpop.xlane.xlu0 %571
  %v573 = vsel %vm344, %v123, 0.0
  %v574 = vadd.f32 %v122, %v573
  %575 = vadd.xlane.f32.xlu0 %v574
  %v576 = vpop.xlane.xlu0 %575
  %v577 = vsel %vm344, %v125, 0.0
  %v578 = vadd.f32 %v124, %v577
  %579 = vadd.xlane.f32.xlu0 %v578
  %v580 = vpop.xlane.xlu0 %579
  %v581 = vsel %vm344, %v127, 0.0
  %v582 = vadd.f32 %v126, %v581
  %583 = vadd.xlane.f32.xlu0 %v582
  %v584 = vpop.xlane.xlu0 %583
  %v585 = vsel %vm344, %v129, 0.0
  %v586 = vadd.f32 %v128, %v585
  %587 = vadd.xlane.f32.xlu0 %v586
  %v588 = vpop.xlane.xlu0 %587
  %v589 = vsel %vm344, %v131, 0.0
  %v590 = vadd.f32 %v130, %v589
  %591 = vadd.xlane.f32.xlu0 %v590
  %v592 = vpop.xlane.xlu0 %591
  %v593 = vsel %vm344, %v133, 0.0
  %v594 = vadd.f32 %v132, %v593
  %595 = vadd.xlane.f32.xlu0 %v594
  %v596 = vpop.xlane.xlu0 %595
  %v597 = vsel %vm344, %v135, 0.0
  %v598 = vadd.f32 %v134, %v597
  %599 = vadd.xlane.f32.xlu0 %v598
  %v600 = vpop.xlane.xlu0 %599
  %v601 = vsel %vm344, %v137, 0.0
  %v602 = vadd.f32 %v136, %v601
  %603 = vadd.xlane.f32.xlu0 %v602
  %v604 = vpop.xlane.xlu0 %603
  %v605 = vsel %vm344, %v139, 0.0
  %v606 = vadd.f32 %v138, %v605
  %607 = vadd.xlane.f32.xlu0 %v606
  %v608 = vpop.xlane.xlu0 %607
  %v609 = vsel %vm344, %v141, 0.0
  %v610 = vadd.f32 %v140, %v609
  %611 = vadd.xlane.f32.xlu0 %v610
  %v612 = vpop.xlane.xlu0 %611
  %v613 = vsel %vm344, %v143, 0.0
  %v614 = vadd.f32 %v142, %v613
  %615 = vadd.xlane.f32.xlu0 %v614
  %v616 = vpop.xlane.xlu0 %615
  %v617 = vsel %vm344, %v145, 0.0
  %v618 = vadd.f32 %v144, %v617
  %619 = vadd.xlane.f32.xlu0 %v618
  %v620 = vpop.xlane.xlu0 %619
  %v621 = vsel %vm344, %v147, 0.0
  %v622 = vadd.f32 %v146, %v621
  %623 = vadd.xlane.f32.xlu0 %v622
  %v624 = vpop.xlane.xlu0 %623
  %v625 = vsel %vm344, %v149, 0.0
  %v626 = vadd.f32 %v148, %v625
  %627 = vadd.xlane.f32.xlu0 %v626
  %v628 = vpop.xlane.xlu0 %627
  %v629 = vsel %vm344, %v151, 0.0
  %v630 = vadd.f32 %v150, %v629
  %631 = vadd.xlane.f32.xlu0 %v630
  %v632 = vpop.xlane.xlu0 %631
  %v633 = vsel %vm344, %v153, 0.0
  %v634 = vadd.f32 %v152, %v633
  %635 = vadd.xlane.f32.xlu0 %v634
  %v636 = vpop.xlane.xlu0 %635
  %v637 = vsel %vm344, %v155, 0.0
  %v638 = vadd.f32 %v154, %v637
  %639 = vadd.xlane.f32.xlu0 %v638
  %v640 = vpop.xlane.xlu0 %639
  %v641 = vsel %vm344, %v157, 0.0
  %v642 = vadd.f32 %v156, %v641
  %643 = vadd.xlane.f32.xlu0 %v642
  %v644 = vpop.xlane.xlu0 %643
  %v645 = vsel %vm344, %v159, 0.0
  %v646 = vadd.f32 %v158, %v645
  %647 = vadd.xlane.f32.xlu0 %v646
  %v648 = vpop.xlane.xlu0 %647
  %v649 = vsel %vm344, %v161, 0.0
  %v650 = vadd.f32 %v160, %v649
  %651 = vadd.xlane.f32.xlu0 %v650
  %v652 = vpop.xlane.xlu0 %651
  %v653 = vsel %vm344, %v163, 0.0
  %v654 = vadd.f32 %v162, %v653
  %655 = vadd.xlane.f32.xlu0 %v654
  %v656 = vpop.xlane.xlu0 %655
  %v657 = vsel %vm344, %v165, 0.0
  %v658 = vadd.f32 %v164, %v657
  %659 = vadd.xlane.f32.xlu0 %v658
  %v660 = vpop.xlane.xlu0 %659
  %v661 = vsel %vm344, %v167, 0.0
  %v662 = vadd.f32 %v166, %v661
  %663 = vadd.xlane.f32.xlu0 %v662
  %v664 = vpop.xlane.xlu0 %663
  %v665 = vsel %vm344, %v169, 0.0
  %v666 = vadd.f32 %v168, %v665
  %667 = vadd.xlane.f32.xlu0 %v666
  %v668 = vpop.xlane.xlu0 %667
  %v669 = vsel %vm344, %v171, 0.0
  %v670 = vadd.f32 %v170, %v669
  %671 = vadd.xlane.f32.xlu0 %v670
  %v672 = vpop.xlane.xlu0 %671
  %v673 = vsel %vm344, %v173, 0.0
  %v674 = vadd.f32 %v172, %v673
  %675 = vadd.xlane.f32.xlu0 %v674
  %v676 = vpop.xlane.xlu0 %675
  %v677 = vsel %vm344, %v175, 0.0
  %v678 = vadd.f32 %v174, %v677
  %679 = vadd.xlane.f32.xlu0 %v678
  %v680 = vpop.xlane.xlu0 %679
  %v681 = vsel %vm344, %v177, 0.0
  %v682 = vadd.f32 %v176, %v681
  %683 = vadd.xlane.f32.xlu0 %v682
  %v684 = vpop.xlane.xlu0 %683
  %v685 = vsel %vm344, %v179, 0.0
  %v686 = vadd.f32 %v178, %v685
  %687 = vadd.xlane.f32.xlu0 %v686
  %v688 = vpop.xlane.xlu0 %687
  %v689 = vsel %vm344, %v181, 0.0
  %v690 = vadd.f32 %v180, %v689
  %691 = vadd.xlane.f32.xlu0 %v690
  %v692 = vpop.xlane.xlu0 %691
  %v693 = vsel %vm344, %v183, 0.0
  %v694 = vadd.f32 %v182, %v693
  %695 = vadd.xlane.f32.xlu0 %v694
  %v696 = vpop.xlane.xlu0 %695
  %v697 = vsel %vm344, %v185, 0.0
  %v698 = vadd.f32 %v184, %v697
  %699 = vadd.xlane.f32.xlu0 %v698
  %v700 = vpop.xlane.xlu0 %699
  %v701 = vsel %vm344, %v187, 0.0
  %v702 = vadd.f32 %v186, %v701
  %703 = vadd.xlane.f32.xlu0 %v702
  %v704 = vpop.xlane.xlu0 %703
  %v705 = vsel %vm344, %v189, 0.0
  %v706 = vadd.f32 %v188, %v705
  %707 = vadd.xlane.f32.xlu0 %v706
  %v708 = vpop.xlane.xlu0 %707
  %v709 = vsel %vm344, %v191, 0.0
  %v710 = vadd.f32 %v190, %v709
  %711 = vadd.xlane.f32.xlu0 %v710
  %v712 = vpop.xlane.xlu0 %711
  %v713 = vsel %vm344, %v193, 0.0
  %v714 = vadd.f32 %v192, %v713
  %715 = vadd.xlane.f32.xlu0 %v714
  %v716 = vpop.xlane.xlu0 %715
  %v717 = vsel %vm344, %v195, 0.0
  %v718 = vadd.f32 %v194, %v717
  %719 = vadd.xlane.f32.xlu0 %v718
  %v720 = vpop.xlane.xlu0 %719
  %v721 = vsel %vm344, %v197, 0.0
  %v722 = vadd.f32 %v196, %v721
  %723 = vadd.xlane.f32.xlu0 %v722
  %v724 = vpop.xlane.xlu0 %723
  %v725 = vsel %vm344, %v199, 0.0
  %v726 = vadd.f32 %v198, %v725
  %727 = vadd.xlane.f32.xlu0 %v726
  %v728 = vpop.xlane.xlu0 %727
  %v729 = vsel %vm344, %v201, 0.0
  %v730 = vadd.f32 %v200, %v729
  %731 = vadd.xlane.f32.xlu0 %v730
  %v732 = vpop.xlane.xlu0 %731
  %v733 = vsel %vm344, %v203, 0.0
  %v734 = vadd.f32 %v202, %v733
  %735 = vadd.xlane.f32.xlu0 %v734
  %v736 = vpop.xlane.xlu0 %735
  %v737 = vsel %vm344, %v205, 0.0
  %v738 = vadd.f32 %v204, %v737
  %739 = vadd.xlane.f32.xlu0 %v738
  %v740 = vpop.xlane.xlu0 %739
  %v741 = vsel %vm344, %v207, 0.0
  %v742 = vadd.f32 %v206, %v741
  %743 = vadd.xlane.f32.xlu0 %v742
  %v744 = vpop.xlane.xlu0 %743
  %v745 = vsel %vm344, %v209, 0.0
  %v746 = vadd.f32 %v208, %v745
  %747 = vadd.xlane.f32.xlu0 %v746
  %v748 = vpop.xlane.xlu0 %747
  %v749 = vsel %vm344, %v211, 0.0
  %v750 = vadd.f32 %v210, %v749
  %751 = vadd.xlane.f32.xlu0 %v750
  %v752 = vpop.xlane.xlu0 %751
  %v753 = vsel %vm344, %v213, 0.0
  %v754 = vadd.f32 %v212, %v753
  %755 = vadd.xlane.f32.xlu0 %v754
  %v756 = vpop.xlane.xlu0 %755
  %v757 = vsel %vm344, %v215, 0.0
  %v758 = vadd.f32 %v214, %v757
  %759 = vadd.xlane.f32.xlu0 %v758
  %v760 = vpop.xlane.xlu0 %759
  %v761 = vsel %vm344, %v217, 0.0
  %v762 = vadd.f32 %v216, %v761
  %763 = vadd.xlane.f32.xlu0 %v762
  %v764 = vpop.xlane.xlu0 %763
  %v765 = vsel %vm344, %v219, 0.0
  %v766 = vadd.f32 %v218, %v765
  %767 = vadd.xlane.f32.xlu0 %v766
  %v768 = vpop.xlane.xlu0 %767
  %v769 = vsel %vm344, %v221, 0.0
  %v770 = vadd.f32 %v220, %v769
  %771 = vadd.xlane.f32.xlu0 %v770
  %v772 = vpop.xlane.xlu0 %771
  %v773 = vsel %vm344, %v223, 0.0
  %v774 = vadd.f32 %v222, %v773
  %775 = vadd.xlane.f32.xlu0 %v774
  %v776 = vpop.xlane.xlu0 %775
  %v777 = vsel %vm344, %v225, 0.0
  %v778 = vadd.f32 %v224, %v777
  %779 = vadd.xlane.f32.xlu0 %v778
  %v780 = vpop.xlane.xlu0 %779
  %v781 = vsel %vm344, %v227, 0.0
  %v782 = vadd.f32 %v226, %v781
  %783 = vadd.xlane.f32.xlu0 %v782
  %v784 = vpop.xlane.xlu0 %783
  %v785 = vsel %vm344, %v229, 0.0
  %v786 = vadd.f32 %v228, %v785
  %787 = vadd.xlane.f32.xlu0 %v786
  %v788 = vpop.xlane.xlu0 %787
  %v789 = vsel %vm344, %v231, 0.0
  %v790 = vadd.f32 %v230, %v789
  %791 = vadd.xlane.f32.xlu0 %v790
  %v792 = vpop.xlane.xlu0 %791
  %v793 = vsel %vm344, %v233, 0.0
  %v794 = vadd.f32 %v232, %v793
  %795 = vadd.xlane.f32.xlu0 %v794
  %v796 = vpop.xlane.xlu0 %795
  %v797 = vsel %vm344, %v235, 0.0
  %v798 = vadd.f32 %v234, %v797
  %799 = vadd.xlane.f32.xlu0 %v798
  %v800 = vpop.xlane.xlu0 %799
  %v801 = vsel %vm344, %v237, 0.0
  %v802 = vadd.f32 %v236, %v801
  %803 = vadd.xlane.f32.xlu0 %v802
  %v804 = vpop.xlane.xlu0 %803
  %v805 = vsel %vm344, %v239, 0.0
  %v806 = vadd.f32 %v238, %v805
  %807 = vadd.xlane.f32.xlu0 %v806
  %v808 = vpop.xlane.xlu0 %807
  %v809 = vsel %vm344, %v241, 0.0
  %v810 = vadd.f32 %v240, %v809
  %811 = vadd.xlane.f32.xlu0 %v810
  %v812 = vpop.xlane.xlu0 %811
  %v813 = vsel %vm344, %v243, 0.0
  %v814 = vadd.f32 %v242, %v813
  %815 = vadd.xlane.f32.xlu0 %v814
  %v816 = vpop.xlane.xlu0 %815
  %v817 = vsel %vm344, %v245, 0.0
  %v818 = vadd.f32 %v244, %v817
  %819 = vadd.xlane.f32.xlu0 %v818
  %v820 = vpop.xlane.xlu0 %819
  %v821 = vsel %vm344, %v247, 0.0
  %v822 = vadd.f32 %v246, %v821
  %823 = vadd.xlane.f32.xlu0 %v822
  %v824 = vpop.xlane.xlu0 %823
  %v825 = vsel %vm344, %v249, 0.0
  %v826 = vadd.f32 %v248, %v825
  %827 = vadd.xlane.f32.xlu0 %v826
  %v828 = vpop.xlane.xlu0 %827
  %v829 = vsel %vm344, %v251, 0.0
  %v830 = vadd.f32 %v250, %v829
  %831 = vadd.xlane.f32.xlu0 %v830
  %v832 = vpop.xlane.xlu0 %831
  %v833 = vsel %vm344, %v253, 0.0
  %v834 = vadd.f32 %v252, %v833
  %835 = vadd.xlane.f32.xlu0 %v834
  %v836 = vpop.xlane.xlu0 %835
  %v837 = vsel %vm344, %v255, 0.0
  %v838 = vadd.f32 %v254, %v837
  %839 = vadd.xlane.f32.xlu0 %v838
  %v840 = vpop.xlane.xlu0 %839
  %v841 = vsel %vm344, %v257, 0.0
  %v842 = vadd.f32 %v256, %v841
  %843 = vadd.xlane.f32.xlu0 %v842
  %v844 = vpop.xlane.xlu0 %843
  %v845 = vsel %vm344, %v259, 0.0
  %v846 = vadd.f32 %v258, %v845
  %847 = vadd.xlane.f32.xlu0 %v846
  %v848 = vpop.xlane.xlu0 %847
  %v849 = vsel %vm344, %v261, 0.0
  %v850 = vadd.f32 %v260, %v849
  %851 = vadd.xlane.f32.xlu0 %v850
  %v852 = vpop.xlane.xlu0 %851
  %v853 = vsel %vm344, %v263, 0.0
  %v854 = vadd.f32 %v262, %v853
  %855 = vadd.xlane.f32.xlu0 %v854
  %v856 = vpop.xlane.xlu0 %855
  %v857 = vsel %vm344, %v265, 0.0
  %v858 = vadd.f32 %v264, %v857
  %859 = vadd.xlane.f32.xlu0 %v858
  %v860 = vpop.xlane.xlu0 %859
  %v861 = vsel %vm344, %v267, 0.0
  %v862 = vadd.f32 %v266, %v861
  %863 = vadd.xlane.f32.xlu0 %v862
  %v864 = vpop.xlane.xlu0 %863
  %v865 = vsel %vm344, %v269, 0.0
  %v866 = vadd.f32 %v268, %v865
  %867 = vadd.xlane.f32.xlu0 %v866
  %v868 = vpop.xlane.xlu0 %867
  %v869 = vsel %vm344, %v271, 0.0
  %v870 = vadd.f32 %v270, %v869
  %871 = vadd.xlane.f32.xlu0 %v870
  %v872 = vpop.xlane.xlu0 %871
  %v873 = vsel %vm344, %v273, 0.0
  %v874 = vadd.f32 %v272, %v873
  %875 = vadd.xlane.f32.xlu0 %v874
  %v876 = vpop.xlane.xlu0 %875
  %v877 = vsel %vm344, %v275, 0.0
  %v878 = vadd.f32 %v274, %v877
  %879 = vadd.xlane.f32.xlu0 %v878
  %v880 = vpop.xlane.xlu0 %879
  %v881 = vsel %vm344, %v277, 0.0
  %v882 = vadd.f32 %v276, %v881
  %883 = vadd.xlane.f32.xlu0 %v882
  %v884 = vpop.xlane.xlu0 %883
  %v885 = vsel %vm344, %v279, 0.0
  %v886 = vadd.f32 %v278, %v885
  %887 = vadd.xlane.f32.xlu0 %v886
  %v888 = vpop.xlane.xlu0 %887
  %v889 = vsel %vm344, %v281, 0.0
  %v890 = vadd.f32 %v280, %v889
  %891 = vadd.xlane.f32.xlu0 %v890
  %v892 = vpop.xlane.xlu0 %891
  %v893 = vsel %vm344, %v283, 0.0
  %v894 = vadd.f32 %v282, %v893
  %895 = vadd.xlane.f32.xlu0 %v894
  %v896 = vpop.xlane.xlu0 %895
  %v897 = vsel %vm344, %v285, 0.0
  %v898 = vadd.f32 %v284, %v897
  %899 = vadd.xlane.f32.xlu0 %v898
  %v900 = vpop.xlane.xlu0 %899
  %v901 = vsel %vm344, %v287, 0.0
  %v902 = vadd.f32 %v286, %v901
  %903 = vadd.xlane.f32.xlu0 %v902
  %v904 = vpop.xlane.xlu0 %903
  %v905 = vsel %vm344, %v289, 0.0
  %v906 = vadd.f32 %v288, %v905
  %907 = vadd.xlane.f32.xlu0 %v906
  %v908 = vpop.xlane.xlu0 %907
  %v909 = vsel %vm344, %v291, 0.0
  %v910 = vadd.f32 %v290, %v909
  %911 = vadd.xlane.f32.xlu0 %v910
  %v912 = vpop.xlane.xlu0 %911
  %v913 = vsel %vm344, %v293, 0.0
  %v914 = vadd.f32 %v292, %v913
  %915 = vadd.xlane.f32.xlu0 %v914
  %v916 = vpop.xlane.xlu0 %915
  %v917 = vsel %vm344, %v295, 0.0
  %v918 = vadd.f32 %v294, %v917
  %919 = vadd.xlane.f32.xlu0 %v918
  %v920 = vpop.xlane.xlu0 %919
  %v921 = vsel %vm344, %v297, 0.0
  %v922 = vadd.f32 %v296, %v921
  %923 = vadd.xlane.f32.xlu0 %v922
  %v924 = vpop.xlane.xlu0 %923
  %v925 = vsel %vm344, %v299, 0.0
  %v926 = vadd.f32 %v298, %v925
  %927 = vadd.xlane.f32.xlu0 %v926
  %v928 = vpop.xlane.xlu0 %927
  %v929 = vsel %vm344, %v301, 0.0
  %v930 = vadd.f32 %v300, %v929
  %931 = vadd.xlane.f32.xlu0 %v930
  %v932 = vpop.xlane.xlu0 %931
  %v933 = vsel %vm344, %v303, 0.0
  %v934 = vadd.f32 %v302, %v933
  %935 = vadd.xlane.f32.xlu0 %v934
  %v936 = vpop.xlane.xlu0 %935
  %v937 = vsel %vm344, %v305, 0.0
  %v938 = vadd.f32 %v304, %v937
  %939 = vadd.xlane.f32.xlu0 %v938
  %v940 = vpop.xlane.xlu0 %939
  %v941 = vsel %vm344, %v307, 0.0
  %v942 = vadd.f32 %v306, %v941
  %943 = vadd.xlane.f32.xlu0 %v942
  %v944 = vpop.xlane.xlu0 %943
  %v945 = vsel %vm344, %v309, 0.0
  %v946 = vadd.f32 %v308, %v945
  %947 = vadd.xlane.f32.xlu0 %v946
  %v948 = vpop.xlane.xlu0 %947
  %v949 = vsel %vm344, %v311, 0.0
  %v950 = vadd.f32 %v310, %v949
  %951 = vadd.xlane.f32.xlu0 %v950
  %v952 = vpop.xlane.xlu0 %951
  %v953 = vsel %vm344, %v313, 0.0
  %v954 = vadd.f32 %v312, %v953
  %955 = vadd.xlane.f32.xlu0 %v954
  %v956 = vpop.xlane.xlu0 %955
  %v957 = vsel %vm344, %v315, 0.0
  %v958 = vadd.f32 %v314, %v957
  %959 = vadd.xlane.f32.xlu0 %v958
  %v960 = vpop.xlane.xlu0 %959
  %v961 = vsel %vm344, %v317, 0.0
  %v962 = vadd.f32 %v316, %v961
  %963 = vadd.xlane.f32.xlu0 %v962
  %v964 = vpop.xlane.xlu0 %963
  %v965 = vsel %vm344, %v319, 0.0
  %v966 = vadd.f32 %v318, %v965
  %967 = vadd.xlane.f32.xlu0 %v966
  %v968 = vpop.xlane.xlu0 %967
  %v969 = vsel %vm344, %v321, 0.0
  %v970 = vadd.f32 %v320, %v969
  %971 = vadd.xlane.f32.xlu0 %v970
  %v972 = vpop.xlane.xlu0 %971
  %v973 = vsel %vm344, %v323, 0.0
  %v974 = vadd.f32 %v322, %v973
  %975 = vadd.xlane.f32.xlu0 %v974
  %v976 = vpop.xlane.xlu0 %975
  %v977 = vsel %vm344, %v325, 0.0
  %v978 = vadd.f32 %v324, %v977
  %979 = vadd.xlane.f32.xlu0 %v978
  %v980 = vpop.xlane.xlu0 %979
  %v981 = vsel %vm344, %v327, 0.0
  %v982 = vadd.f32 %v326, %v981
  %983 = vadd.xlane.f32.xlu0 %v982
  %v984 = vpop.xlane.xlu0 %983
  %v985 = vsel %vm344, %v329, 0.0
  %v986 = vadd.f32 %v328, %v985
  %987 = vadd.xlane.f32.xlu0 %v986
  %v988 = vpop.xlane.xlu0 %987
  %v989 = vsel %vm344, %v331, 0.0
  %v990 = vadd.f32 %v330, %v989
  %991 = vadd.xlane.f32.xlu0 %v990
  %v992 = vpop.xlane.xlu0 %991
  %v993 = vsel %vm344, %v333, 0.0
  %v994 = vadd.f32 %v332, %v993
  %995 = vadd.xlane.f32.xlu0 %v994
  %v996 = vpop.xlane.xlu0 %995
  %v997 = vsel %vm344, %v335, 0.0
  %v998 = vadd.f32 %v334, %v997
  %999 = vadd.xlane.f32.xlu0 %v998
  %v1000 = vpop.xlane.xlu0 %999
  %v1001 = vsel %vm344, %v337, 0.0
  %v1002 = vadd.f32 %v336, %v1001
  %1003 = vadd.xlane.f32.xlu0 %v1002
  %v1004 = vpop.xlane.xlu0 %1003
  %v1005 = vsel %vm344, %v339, 0.0
  %v1006 = vadd.f32 %v338, %v1005
  %1007 = vadd.xlane.f32.xlu0 %v1006
  %v1008 = vpop.xlane.xlu0 %1007
  %v1009 = vsel %vm344, %v341, 0.0
  %v1010 = vadd.f32 %v340, %v1009
  %1011 = vadd.xlane.f32.xlu0 %v1010
  %v1012 = vpop.xlane.xlu0 %1011
  %v1013 = vsel %vm344, %v343, 0.0
  %v1014 = vadd.f32 %v342, %v1013
  %1015 = vadd.xlane.f32.xlu0 %v1014
  %v1016 = vpop.xlane.xlu0 %1015
  %v1017 = vmul.f32 %v348, 0.0051020407
  %v1018 = vmul.f32 %v352, 0.0051020407
  %v1019 = vmul.f32 %v356, 0.0051020407
  %v1020 = vmul.f32 %v360, 0.0051020407
  %v1021 = vmul.f32 %v364, 0.0051020407
  %v1022 = vmul.f32 %v368, 0.0051020407
  %v1023 = vmul.f32 %v372, 0.0051020407
  %v1024 = vmul.f32 %v376, 0.0051020407
  %v1025 = vmul.f32 %v380, 0.0051020407
  %v1026 = vmul.f32 %v384, 0.0051020407
  %v1027 = vmul.f32 %v388, 0.0051020407
  %v1028 = vmul.f32 %v392, 0.0051020407
  %v1029 = vmul.f32 %v396, 0.0051020407
  %v1030 = vmul.f32 %v400, 0.0051020407
  %v1031 = vmul.f32 %v404, 0.0051020407
  %v1032 = vmul.f32 %v408, 0.0051020407
  %v1033 = vmul.f32 %v412, 0.0051020407
  %v1034 = vmul.f32 %v416, 0.0051020407
  %v1035 = vmul.f32 %v420, 0.0051020407
  %v1036 = vmul.f32 %v424, 0.0051020407
  %v1037 = vmul.f32 %v428, 0.0051020407
  %v1038 = vmul.f32 %v432, 0.0051020407
  %v1039 = vmul.f32 %v436, 0.0051020407
  %v1040 = vmul.f32 %v440, 0.0051020407
  %v1041 = vmul.f32 %v444, 0.0051020407
  %v1042 = vmul.f32 %v448, 0.0051020407
  %v1043 = vmul.f32 %v452, 0.0051020407
  %v1044 = vmul.f32 %v456, 0.0051020407
  %v1045 = vmul.f32 %v460, 0.0051020407
  %v1046 = vmul.f32 %v464, 0.0051020407
  %v1047 = vmul.f32 %v468, 0.0051020407
  %v1048 = vmul.f32 %v472, 0.0051020407
  %v1049 = vmul.f32 %v476, 0.0051020407
  %v1050 = vmul.f32 %v480, 0.0051020407
  %v1051 = vmul.f32 %v484, 0.0051020407
  %v1052 = vmul.f32 %v488, 0.0051020407
  %v1053 = vmul.f32 %v492, 0.0051020407
  %v1054 = vmul.f32 %v496, 0.0051020407
  %v1055 = vmul.f32 %v500, 0.0051020407
  %v1056 = vmul.f32 %v504, 0.0051020407
  %v1057 = vmul.f32 %v508, 0.0051020407
  %v1058 = vmul.f32 %v512, 0.0051020407
  %v1059 = vmul.f32 %v516, 0.0051020407
  %v1060 = vmul.f32 %v520, 0.0051020407
  %v1061 = vmul.f32 %v524, 0.0051020407
  %v1062 = vmul.f32 %v528, 0.0051020407
  %v1063 = vmul.f32 %v532, 0.0051020407
  %v1064 = vmul.f32 %v536, 0.0051020407
  %v1065 = vmul.f32 %v540, 0.0051020407
  %v1066 = vmul.f32 %v544, 0.0051020407
  %v1067 = vmul.f32 %v548, 0.0051020407
  %v1068 = vmul.f32 %v552, 0.0051020407
  %v1069 = vmul.f32 %v556, 0.0051020407
  %v1070 = vmul.f32 %v560, 0.0051020407
  %v1071 = vmul.f32 %v564, 0.0051020407
  %v1072 = vmul.f32 %v568, 0.0051020407
  %v1073 = vmul.f32 %v572, 0.0051020407
  %v1074 = vmul.f32 %v576, 0.0051020407
  %v1075 = vmul.f32 %v580, 0.0051020407
  %v1076 = vmul.f32 %v584, 0.0051020407
  %v1077 = vmul.f32 %v588, 0.0051020407
  %v1078 = vmul.f32 %v592, 0.0051020407
  %v1079 = vmul.f32 %v596, 0.0051020407
  %v1080 = vmul.f32 %v600, 0.0051020407
  %v1081 = vmul.f32 %v604, 0.0051020407
  %v1082 = vmul.f32 %v608, 0.0051020407
  %v1083 = vmul.f32 %v612, 0.0051020407
  %v1084 = vmul.f32 %v616, 0.0051020407
  %v1085 = vmul.f32 %v620, 0.0051020407
  %v1086 = vmul.f32 %v624, 0.0051020407
  %v1087 = vmul.f32 %v628, 0.0051020407
  %v1088 = vmul.f32 %v632, 0.0051020407
  %v1089 = vmul.f32 %v636, 0.0051020407
  %v1090 = vmul.f32 %v640, 0.0051020407
  %v1091 = vmul.f32 %v644, 0.0051020407
  %v1092 = vmul.f32 %v648, 0.0051020407
  %v1093 = vmul.f32 %v652, 0.0051020407
  %v1094 = vmul.f32 %v656, 0.0051020407
  %v1095 = vmul.f32 %v660, 0.0051020407
  %v1096 = vmul.f32 %v664, 0.0051020407
  %v1097 = vmul.f32 %v668, 0.0051020407
  %v1098 = vmul.f32 %v672, 0.0051020407
  %v1099 = vmul.f32 %v676, 0.0051020407
  %v1100 = vmul.f32 %v680, 0.0051020407
  %v1101 = vmul.f32 %v684, 0.0051020407
  %v1102 = vmul.f32 %v688, 0.0051020407
  %v1103 = vmul.f32 %v692, 0.0051020407
  %v1104 = vmul.f32 %v696, 0.0051020407
  %v1105 = vmul.f32 %v700, 0.0051020407
  %v1106 = vmul.f32 %v704, 0.0051020407
  %v1107 = vmul.f32 %v708, 0.0051020407
  %v1108 = vmul.f32 %v712, 0.0051020407
  %v1109 = vmul.f32 %v716, 0.0051020407
  %v1110 = vmul.f32 %v720, 0.0051020407
  %v1111 = vmul.f32 %v724, 0.0051020407
  %v1112 = vmul.f32 %v728, 0.0051020407
  %v1113 = vmul.f32 %v732, 0.0051020407
  %v1114 = vmul.f32 %v736, 0.0051020407
  %v1115 = vmul.f32 %v740, 0.0051020407
  %v1116 = vmul.f32 %v744, 0.0051020407
  %v1117 = vmul.f32 %v748, 0.0051020407
  %v1118 = vmul.f32 %v752, 0.0051020407
  %v1119 = vmul.f32 %v756, 0.0051020407
  %v1120 = vmul.f32 %v760, 0.0051020407
  %v1121 = vmul.f32 %v764, 0.0051020407
  %v1122 = vmul.f32 %v768, 0.0051020407
  %v1123 = vmul.f32 %v772, 0.0051020407
  %v1124 = vmul.f32 %v776, 0.0051020407
  %v1125 = vmul.f32 %v780, 0.0051020407
  %v1126 = vmul.f32 %v784, 0.0051020407
  %v1127 = vmul.f32 %v788, 0.0051020407
  %v1128 = vmul.f32 %v792, 0.0051020407
  %v1129 = vmul.f32 %v796, 0.0051020407
  %v1130 = vmul.f32 %v800, 0.0051020407
  %v1131 = vmul.f32 %v804, 0.0051020407
  %v1132 = vmul.f32 %v808, 0.0051020407
  %v1133 = vmul.f32 %v812, 0.0051020407
  %v1134 = vmul.f32 %v816, 0.0051020407
  %v1135 = vmul.f32 %v820, 0.0051020407
  %v1136 = vmul.f32 %v824, 0.0051020407
  %v1137 = vmul.f32 %v828, 0.0051020407
  %v1138 = vmul.f32 %v832, 0.0051020407
  %v1139 = vmul.f32 %v836, 0.0051020407
  %v1140 = vmul.f32 %v840, 0.0051020407
  %v1141 = vmul.f32 %v844, 0.0051020407
  %v1142 = vmul.f32 %v848, 0.0051020407
  %v1143 = vmul.f32 %v852, 0.0051020407
  %v1144 = vmul.f32 %v856, 0.0051020407
  %v1145 = vmul.f32 %v860, 0.0051020407
  %v1146 = vmul.f32 %v864, 0.0051020407
  %v1147 = vmul.f32 %v868, 0.0051020407
  %v1148 = vmul.f32 %v872, 0.0051020407
  %v1149 = vmul.f32 %v876, 0.0051020407
  %v1150 = vmul.f32 %v880, 0.0051020407
  %v1151 = vmul.f32 %v884, 0.0051020407
  %v1152 = vmul.f32 %v888, 0.0051020407
  %v1153 = vmul.f32 %v892, 0.0051020407
  %v1154 = vmul.f32 %v896, 0.0051020407
  %v1155 = vmul.f32 %v900, 0.0051020407
  %v1156 = vmul.f32 %v904, 0.0051020407
  %v1157 = vmul.f32 %v908, 0.0051020407
  %v1158 = vmul.f32 %v912, 0.0051020407
  %v1159 = vmul.f32 %v916, 0.0051020407
  %v1160 = vmul.f32 %v920, 0.0051020407
  %v1161 = vmul.f32 %v924, 0.0051020407
  %v1162 = vmul.f32 %v928, 0.0051020407
  %v1163 = vmul.f32 %v932, 0.0051020407
  %v1164 = vmul.f32 %v936, 0.0051020407
  %v1165 = vmul.f32 %v940, 0.0051020407
  %v1166 = vmul.f32 %v944, 0.0051020407
  %v1167 = vmul.f32 %v948, 0.0051020407
  %v1168 = vmul.f32 %v952, 0.0051020407
  %v1169 = vmul.f32 %v956, 0.0051020407
  %v1170 = vmul.f32 %v960, 0.0051020407
  %v1171 = vmul.f32 %v964, 0.0051020407
  %v1172 = vmul.f32 %v968, 0.0051020407
  %v1173 = vmul.f32 %v972, 0.0051020407
  %v1174 = vmul.f32 %v976, 0.0051020407
  %v1175 = vmul.f32 %v980, 0.0051020407
  %v1176 = vmul.f32 %v984, 0.0051020407
  %v1177 = vmul.f32 %v988, 0.0051020407
  %v1178 = vmul.f32 %v992, 0.0051020407
  %v1179 = vmul.f32 %v996, 0.0051020407
  %v1180 = vmul.f32 %v1000, 0.0051020407
  %v1181 = vmul.f32 %v1004, 0.0051020407
  %v1182 = vmul.f32 %v1008, 0.0051020407
  %v1183 = vmul.f32 %v1012, 0.0051020407
  %v1184 = vmul.f32 %v1016, 0.0051020407
  %vm1185 = vcmask 7168
  %1186 = vst.msk [vmem:[%s1] sm:$0xff] %vm1185, %v1017
  %1187 = vst.msk [vmem:[%s1 + $0x8] sm:$0xff] %vm1185, %v1018
  %1188 = vst.msk [vmem:[%s1 + $0x10] sm:$0xff] %vm1185, %v1019
  %1189 = vst.msk [vmem:[%s1 + $0x18] sm:$0xff] %vm1185, %v1020
  %1190 = vst.msk [vmem:[%s1 + $0x20] sm:$0xff] %vm1185, %v1021
  %1191 = vst.msk [vmem:[%s1 + $0x28] sm:$0xff] %vm1185, %v1022
  %1192 = vst.msk [vmem:[%s1 + $0x30] sm:$0xff] %vm1185, %v1023
  %1193 = vst.msk [vmem:[%s1 + $0x38] sm:$0xff] %vm1185, %v1024
  %1194 = vst.msk [vmem:[%s1 + $0x40] sm:$0xff] %vm1185, %v1025
  %1195 = vst.msk [vmem:[%s1 + $0x48] sm:$0xff] %vm1185, %v1026
  %1196 = vst.msk [vmem:[%s1 + $0x50] sm:$0xff] %vm1185, %v1027
  %1197 = vst.msk [vmem:[%s1 + $0x58] sm:$0xff] %vm1185, %v1028
  %1198 = vst.msk [vmem:[%s1 + $0x60] sm:$0xff] %vm1185, %v1029
  %1199 = vst.msk [vmem:[%s1 + $0x68] sm:$0xff] %vm1185, %v1030
  %1200 = vst.msk [vmem:[%s1 + $0x70] sm:$0xff] %vm1185, %v1031
  %1201 = vst.msk [vmem:[%s1 + $0x78] sm:$0xff] %vm1185, %v1032
  %1202 = vst.msk [vmem:[%s1 + $0x80] sm:$0xff] %vm1185, %v1033
  %1203 = vst.msk [vmem:[%s1 + $0x88] sm:$0xff] %vm1185, %v1034
  %1204 = vst.msk [vmem:[%s1 + $0x90] sm:$0xff] %vm1185, %v1035
  %1205 = vst.msk [vmem:[%s1 + $0x98] sm:$0xff] %vm1185, %v1036
  %1206 = vst.msk [vmem:[%s1 + $0xa0] sm:$0xff] %vm1185, %v1037
  %1207 = vst.msk [vmem:[%s1 + $0xa8] sm:$0xff] %vm1185, %v1038
  %1208 = vst.msk [vmem:[%s1 + $0xb0] sm:$0xff] %vm1185, %v1039
  %1209 = vst.msk [vmem:[%s1 + $0xb8] sm:$0xff] %vm1185, %v1040
  %1210 = vst.msk [vmem:[%s1 + $0xc0] sm:$0xff] %vm1185, %v1041
  %1211 = vst.msk [vmem:[%s1 + $0xc8] sm:$0xff] %vm1185, %v1042
  %1212 = vst.msk [vmem:[%s1 + $0xd0] sm:$0xff] %vm1185, %v1043
  %1213 = vst.msk [vmem:[%s1 + $0xd8] sm:$0xff] %vm1185, %v1044
  %1214 = vst.msk [vmem:[%s1 + $0xe0] sm:$0xff] %vm1185, %v1045
  %1215 = vst.msk [vmem:[%s1 + $0xe8] sm:$0xff] %vm1185, %v1046
  %1216 = vst.msk [vmem:[%s1 + $0xf0] sm:$0xff] %vm1185, %v1047
  %1217 = vst.msk [vmem:[%s1 + $0xf8] sm:$0xff] %vm1185, %v1048
  %1218 = vst.msk [vmem:[%s1 + $0x100] sm:$0xff] %vm1185, %v1049
  %1219 = vst.msk [vmem:[%s1 + $0x108] sm:$0xff] %vm1185, %v1050
  %1220 = vst.msk [vmem:[%s1 + $0x110] sm:$0xff] %vm1185, %v1051
  %1221 = vst.msk [vmem:[%s1 + $0x118] sm:$0xff] %vm1185, %v1052
  %1222 = vst.msk [vmem:[%s1 + $0x120] sm:$0xff] %vm1185, %v1053
  %1223 = vst.msk [vmem:[%s1 + $0x128] sm:$0xff] %vm1185, %v1054
  %1224 = vst.msk [vmem:[%s1 + $0x130] sm:$0xff] %vm1185, %v1055
  %1225 = vst.msk [vmem:[%s1 + $0x138] sm:$0xff] %vm1185, %v1056
  %1226 = vst.msk [vmem:[%s1 + $0x140] sm:$0xff] %vm1185, %v1057
  %1227 = vst.msk [vmem:[%s1 + $0x148] sm:$0xff] %vm1185, %v1058
  %1228 = vst.msk [vmem:[%s1 + $0x150] sm:$0xff] %vm1185, %v1059
  %1229 = vst.msk [vmem:[%s1 + $0x158] sm:$0xff] %vm1185, %v1060
  %1230 = vst.msk [vmem:[%s1 + $0x160] sm:$0xff] %vm1185, %v1061
  %1231 = vst.msk [vmem:[%s1 + $0x168] sm:$0xff] %vm1185, %v1062
  %1232 = vst.msk [vmem:[%s1 + $0x170] sm:$0xff] %vm1185, %v1063
  %1233 = vst.msk [vmem:[%s1 + $0x178] sm:$0xff] %vm1185, %v1064
  %1234 = vst.msk [vmem:[%s1 + $0x180] sm:$0xff] %vm1185, %v1065
  %1235 = vst.msk [vmem:[%s1 + $0x188] sm:$0xff] %vm1185, %v1066
  %1236 = vst.msk [vmem:[%s1 + $0x190] sm:$0xff] %vm1185, %v1067
  %1237 = vst.msk [vmem:[%s1 + $0x198] sm:$0xff] %vm1185, %v1068
  %1238 = vst.msk [vmem:[%s1 + $0x1a0] sm:$0xff] %vm1185, %v1069
  %1239 = vst.msk [vmem:[%s1 + $0x1a8] sm:$0xff] %vm1185, %v1070
  %1240 = vst.msk [vmem:[%s1 + $0x1b0] sm:$0xff] %vm1185, %v1071
  %1241 = vst.msk [vmem:[%s1 + $0x1b8] sm:$0xff] %vm1185, %v1072
  %1242 = vst.msk [vmem:[%s1 + $0x1c0] sm:$0xff] %vm1185, %v1073
  %1243 = vst.msk [vmem:[%s1 + $0x1c8] sm:$0xff] %vm1185, %v1074
  %1244 = vst.msk [vmem:[%s1 + $0x1d0] sm:$0xff] %vm1185, %v1075
  %1245 = vst.msk [vmem:[%s1 + $0x1d8] sm:$0xff] %vm1185, %v1076
  %1246 = vst.msk [vmem:[%s1 + $0x1e0] sm:$0xff] %vm1185, %v1077
  %1247 = vst.msk [vmem:[%s1 + $0x1e8] sm:$0xff] %vm1185, %v1078
  %1248 = vst.msk [vmem:[%s1 + $0x1f0] sm:$0xff] %vm1185, %v1079
  %1249 = vst.msk [vmem:[%s1 + $0x1f8] sm:$0xff] %vm1185, %v1080
  %1250 = vst.msk [vmem:[%s1 + $0x200] sm:$0xff] %vm1185, %v1081
  %1251 = vst.msk [vmem:[%s1 + $0x208] sm:$0xff] %vm1185, %v1082
  %1252 = vst.msk [vmem:[%s1 + $0x210] sm:$0xff] %vm1185, %v1083
  %1253 = vst.msk [vmem:[%s1 + $0x218] sm:$0xff] %vm1185, %v1084
  %1254 = vst.msk [vmem:[%s1 + $0x220] sm:$0xff] %vm1185, %v1085
  %1255 = vst.msk [vmem:[%s1 + $0x228] sm:$0xff] %vm1185, %v1086
  %1256 = vst.msk [vmem:[%s1 + $0x230] sm:$0xff] %vm1185, %v1087
  %1257 = vst.msk [vmem:[%s1 + $0x238] sm:$0xff] %vm1185, %v1088
  %1258 = vst.msk [vmem:[%s1 + $0x240] sm:$0xff] %vm1185, %v1089
  %1259 = vst.msk [vmem:[%s1 + $0x248] sm:$0xff] %vm1185, %v1090
  %1260 = vst.msk [vmem:[%s1 + $0x250] sm:$0xff] %vm1185, %v1091
  %1261 = vst.msk [vmem:[%s1 + $0x258] sm:$0xff] %vm1185, %v1092
  %1262 = vst.msk [vmem:[%s1 + $0x260] sm:$0xff] %vm1185, %v1093
  %1263 = vst.msk [vmem:[%s1 + $0x268] sm:$0xff] %vm1185, %v1094
  %1264 = vst.msk [vmem:[%s1 + $0x270] sm:$0xff] %vm1185, %v1095
  %1265 = vst.msk [vmem:[%s1 + $0x278] sm:$0xff] %vm1185, %v1096
  %1266 = vst.msk [vmem:[%s1 + $0x280] sm:$0xff] %vm1185, %v1097
  %1267 = vst.msk [vmem:[%s1 + $0x288] sm:$0xff] %vm1185, %v1098
  %1268 = vst.msk [vmem:[%s1 + $0x290] sm:$0xff] %vm1185, %v1099
  %1269 = vst.msk [vmem:[%s1 + $0x298] sm:$0xff] %vm1185, %v1100
  %1270 = vst.msk [vmem:[%s1 + $0x2a0] sm:$0xff] %vm1185, %v1101
  %1271 = vst.msk [vmem:[%s1 + $0x2a8] sm:$0xff] %vm1185, %v1102
  %1272 = vst.msk [vmem:[%s1 + $0x2b0] sm:$0xff] %vm1185, %v1103
  %1273 = vst.msk [vmem:[%s1 + $0x2b8] sm:$0xff] %vm1185, %v1104
  %1274 = vst.msk [vmem:[%s1 + $0x2c0] sm:$0xff] %vm1185, %v1105
  %1275 = vst.msk [vmem:[%s1 + $0x2c8] sm:$0xff] %vm1185, %v1106
  %1276 = vst.msk [vmem:[%s1 + $0x2d0] sm:$0xff] %vm1185, %v1107
  %1277 = vst.msk [vmem:[%s1 + $0x2d8] sm:$0xff] %vm1185, %v1108
  %1278 = vst.msk [vmem:[%s1 + $0x2e0] sm:$0xff] %vm1185, %v1109
  %1279 = vst.msk [vmem:[%s1 + $0x2e8] sm:$0xff] %vm1185, %v1110
  %1280 = vst.msk [vmem:[%s1 + $0x2f0] sm:$0xff] %vm1185, %v1111
  %1281 = vst.msk [vmem:[%s1 + $0x2f8] sm:$0xff] %vm1185, %v1112
  %1282 = vst.msk [vmem:[%s1 + $0x300] sm:$0xff] %vm1185, %v1113
  %1283 = vst.msk [vmem:[%s1 + $0x308] sm:$0xff] %vm1185, %v1114
  %1284 = vst.msk [vmem:[%s1 + $0x310] sm:$0xff] %vm1185, %v1115
  %1285 = vst.msk [vmem:[%s1 + $0x318] sm:$0xff] %vm1185, %v1116
  %1286 = vst.msk [vmem:[%s1 + $0x320] sm:$0xff] %vm1185, %v1117
  %1287 = vst.msk [vmem:[%s1 + $0x328] sm:$0xff] %vm1185, %v1118
  %1288 = vst.msk [vmem:[%s1 + $0x330] sm:$0xff] %vm1185, %v1119
  %1289 = vst.msk [vmem:[%s1 + $0x338] sm:$0xff] %vm1185, %v1120
  %1290 = vst.msk [vmem:[%s1 + $0x340] sm:$0xff] %vm1185, %v1121
  %1291 = vst.msk [vmem:[%s1 + $0x348] sm:$0xff] %vm1185, %v1122
  %1292 = vst.msk [vmem:[%s1 + $0x350] sm:$0xff] %vm1185, %v1123
  %1293 = vst.msk [vmem:[%s1 + $0x358] sm:$0xff] %vm1185, %v1124
  %1294 = vst.msk [vmem:[%s1 + $0x360] sm:$0xff] %vm1185, %v1125
  %1295 = vst.msk [vmem:[%s1 + $0x368] sm:$0xff] %vm1185, %v1126
  %1296 = vst.msk [vmem:[%s1 + $0x370] sm:$0xff] %vm1185, %v1127
  %1297 = vst.msk [vmem:[%s1 + $0x378] sm:$0xff] %vm1185, %v1128
  %1298 = vst.msk [vmem:[%s1 + $0x380] sm:$0xff] %vm1185, %v1129
  %1299 = vst.msk [vmem:[%s1 + $0x388] sm:$0xff] %vm1185, %v1130
  %1300 = vst.msk [vmem:[%s1 + $0x390] sm:$0xff] %vm1185, %v1131
  %1301 = vst.msk [vmem:[%s1 + $0x398] sm:$0xff] %vm1185, %v1132
  %1302 = vst.msk [vmem:[%s1 + $0x3a0] sm:$0xff] %vm1185, %v1133
  %1303 = vst.msk [vmem:[%s1 + $0x3a8] sm:$0xff] %vm1185, %v1134
  %1304 = vst.msk [vmem:[%s1 + $0x3b0] sm:$0xff] %vm1185, %v1135
  %1305 = vst.msk [vmem:[%s1 + $0x3b8] sm:$0xff] %vm1185, %v1136
  %1306 = vst.msk [vmem:[%s1 + $0x3c0] sm:$0xff] %vm1185, %v1137
  %1307 = vst.msk [vmem:[%s1 + $0x3c8] sm:$0xff] %vm1185, %v1138
  %1308 = vst.msk [vmem:[%s1 + $0x3d0] sm:$0xff] %vm1185, %v1139
  %1309 = vst.msk [vmem:[%s1 + $0x3d8] sm:$0xff] %vm1185, %v1140
  %1310 = vst.msk [vmem:[%s1 + $0x3e0] sm:$0xff] %vm1185, %v1141
  %1311 = vst.msk [vmem:[%s1 + $0x3e8] sm:$0xff] %vm1185, %v1142
  %1312 = vst.msk [vmem:[%s1 + $0x3f0] sm:$0xff] %vm1185, %v1143
  %1313 = vst.msk [vmem:[%s1 + $0x3f8] sm:$0xff] %vm1185, %v1144
  %1314 = vst.msk [vmem:[%s1 + $0x400] sm:$0xff] %vm1185, %v1145
  %1315 = vst.msk [vmem:[%s1 + $0x408] sm:$0xff] %vm1185, %v1146
  %1316 = vst.msk [vmem:[%s1 + $0x410] sm:$0xff] %vm1185, %v1147
  %1317 = vst.msk [vmem:[%s1 + $0x418] sm:$0xff] %vm1185, %v1148
  %1318 = vst.msk [vmem:[%s1 + $0x420] sm:$0xff] %vm1185, %v1149
  %1319 = vst.msk [vmem:[%s1 + $0x428] sm:$0xff] %vm1185, %v1150
  %1320 = vst.msk [vmem:[%s1 + $0x430] sm:$0xff] %vm1185, %v1151
  %1321 = vst.msk [vmem:[%s1 + $0x438] sm:$0xff] %vm1185, %v1152
  %1322 = vst.msk [vmem:[%s1 + $0x440] sm:$0xff] %vm1185, %v1153
  %1323 = vst.msk [vmem:[%s1 + $0x448] sm:$0xff] %vm1185, %v1154
  %1324 = vst.msk [vmem:[%s1 + $0x450] sm:$0xff] %vm1185, %v1155
  %1325 = vst.msk [vmem:[%s1 + $0x458] sm:$0xff] %vm1185, %v1156
  %1326 = vst.msk [vmem:[%s1 + $0x460] sm:$0xff] %vm1185, %v1157
  %1327 = vst.msk [vmem:[%s1 + $0x468] sm:$0xff] %vm1185, %v1158
  %1328 = vst.msk [vmem:[%s1 + $0x470] sm:$0xff] %vm1185, %v1159
  %1329 = vst.msk [vmem:[%s1 + $0x478] sm:$0xff] %vm1185, %v1160
  %1330 = vst.msk [vmem:[%s1 + $0x480] sm:$0xff] %vm1185, %v1161
  %1331 = vst.msk [vmem:[%s1 + $0x488] sm:$0xff] %vm1185, %v1162
  %1332 = vst.msk [vmem:[%s1 + $0x490] sm:$0xff] %vm1185, %v1163
  %1333 = vst.msk [vmem:[%s1 + $0x498] sm:$0xff] %vm1185, %v1164
  %1334 = vst.msk [vmem:[%s1 + $0x4a0] sm:$0xff] %vm1185, %v1165
  %1335 = vst.msk [vmem:[%s1 + $0x4a8] sm:$0xff] %vm1185, %v1166
  %1336 = vst.msk [vmem:[%s1 + $0x4b0] sm:$0xff] %vm1185, %v1167
  %1337 = vst.msk [vmem:[%s1 + $0x4b8] sm:$0xff] %vm1185, %v1168
  %1338 = vst.msk [vmem:[%s1 + $0x4c0] sm:$0xff] %vm1185, %v1169
  %1339 = vst.msk [vmem:[%s1 + $0x4c8] sm:$0xff] %vm1185, %v1170
  %1340 = vst.msk [vmem:[%s1 + $0x4d0] sm:$0xff] %vm1185, %v1171
  %1341 = vst.msk [vmem:[%s1 + $0x4d8] sm:$0xff] %vm1185, %v1172
  %1342 = vst.msk [vmem:[%s1 + $0x4e0] sm:$0xff] %vm1185, %v1173
  %1343 = vst.msk [vmem:[%s1 + $0x4e8] sm:$0xff] %vm1185, %v1174
  %1344 = vst.msk [vmem:[%s1 + $0x4f0] sm:$0xff] %vm1185, %v1175
  %1345 = vst.msk [vmem:[%s1 + $0x4f8] sm:$0xff] %vm1185, %v1176
  %1346 = vst.msk [vmem:[%s1 + $0x500] sm:$0xff] %vm1185, %v1177
  %1347 = vst.msk [vmem:[%s1 + $0x508] sm:$0xff] %vm1185, %v1178
  %1348 = vst.msk [vmem:[%s1 + $0x510] sm:$0xff] %vm1185, %v1179
  %1349 = vst.msk [vmem:[%s1 + $0x518] sm:$0xff] %vm1185, %v1180
  %1350 = vst.msk [vmem:[%s1 + $0x520] sm:$0xff] %vm1185, %v1181
  %1351 = vst.msk [vmem:[%s1 + $0x528] sm:$0xff] %vm1185, %v1182
  %1352 = vst.msk [vmem:[%s1 + $0x530] sm:$0xff] %vm1185, %v1183
  %1353 = vst.msk [vmem:[%s1 + $0x538] sm:$0xff] %vm1185, %v1184
  // Predicated region
  $region6: #{tpu_custom_call.1} parent=0 // pred_check
    _
  $region7: #{tpu_custom_call.1} parent=0 // pred_check_branch
    %1355 = sbr.rel (0) target = $region9
  $region8: #{tpu_custom_call.1} parent=0 // pred_region
    _
  $region9: #{tpu_custom_call.1} parent=0 // pred_fallthru
    _
  // Predicated region
  $region10: #{tpu_custom_call.1} parent=0 // pred_check
    _
  $region11: #{tpu_custom_call.1} parent=0 // pred_check_branch
    %1357 = sbr.rel (0) target = $region13
  $region12: #{tpu_custom_call.1} parent=0 // pred_region
    _
  $region13: #{tpu_custom_call.1} parent=0 // pred_fallthru
    _

</llo_original>
